<compile_context>
chip_gen: v6e
topology: v6e:2x2x1
jax: 0.10.0
libtpu: 0.0.40
codegen_flags: <defaults>
</compile_context>

<pallas_src>
import functools
import math

import jax
import jax.numpy as jnp
from jax.experimental import pallas as pl
from jax.experimental.pallas import tpu as pltpu


def _encoder_stack_kernel(x_ref,
                          ln1_g, ln1_b,
                          wqkv, bqkv, wo, bo,
                          ln2_g, ln2_b,
                          w1, b1, w2, b2,
                          y_ref, attn_ref,
                          x_state,
                          *, num_heads: int, eps: float = 1e-5,
                          neg_slope: float = 0.01,
                          compute_dtype=jnp.bfloat16):
    bt, S, D = y_ref.shape
    H = num_heads
    hd = D // H
    N = bt * S
    cdt = compute_dtype
    layer = pl.program_id(1)

    # First layer of this batch tile: bring the (embedded + PE) activations into the
    # resident VMEM state; they never round-trip to HBM between layers.
    @pl.when(layer == 0)
    def _():
        x_state[...] = x_ref[...].astype(jnp.float32).reshape(N, D)

    x = x_state[...]                                         # (N, D) f32

    def layer_norm(v, g_ref, b_ref):
        mu = jnp.mean(v, axis=-1, keepdims=True)
        d = v - mu
        var = jnp.mean(d * d, axis=-1, keepdims=True)
        return d * jax.lax.rsqrt(var + eps) * g_ref[...] + b_ref[...]

    # ---- norm1 -> fused QKV projection (score scale pre-folded into Wq / bq) ----
    h1 = layer_norm(x, ln1_g, ln1_b)                         # (N, D) f32
    qkv = jnp.dot(h1.astype(cdt), wqkv[...],
                  preferred_element_type=jnp.float32) + bqkv[...]   # (N, 3D) f32

    # ---- multi-head self-attention: ONE batched einsum over the merged (b, h) dim ----
    def split_heads(off):                                    # -> (bt*H, S, hd), b-major
        parts = [qkv[:, off + h * hd: off + (h + 1) * hd].reshape(bt, 1, S, hd)
                 for h in range(H)]
        return jnp.concatenate(parts, axis=1).reshape(bt * H, S, hd).astype(cdt)

    q = split_heads(0)
    k = split_heads(D)
    v = split_heads(2 * D)

    s = jnp.einsum('nqd,nkd->nqk', q, k,
                   preferred_element_type=jnp.float32)       # (bt*H, S, S) f32
    s = s - jnp.max(s, axis=-1, keepdims=True)
    e = jnp.exp(s)
    p = e * pl.reciprocal(jnp.sum(e, axis=-1, keepdims=True), approx=False)

    # Lane-dense store: (bt*H, S, S) -> block (1, bt, H, S*S); un-flattened outside.
    attn_ref[...] = p.reshape(attn_ref.shape).astype(attn_ref.dtype)

    ctx = jnp.einsum('nqk,nkd->nqd', p.astype(cdt), v,
                     preferred_element_type=jnp.float32)     # (bt*H, S, hd) f32
    # Re-assemble a lane-dense (N, D) context and do ONE full-D output projection
    # (full MXU contraction instead of H matmuls with K = head_dim).
    ctx4 = ctx.reshape(bt, H, S, hd)
    ctx_cat = jnp.concatenate([ctx4[:, h] for h in range(H)], axis=-1)   # (bt, S, D)
    attn_out = jnp.dot(ctx_cat.reshape(N, D).astype(cdt), wo[...],
                       preferred_element_type=jnp.float32) + bo[...]     # (N, D) f32

    # Reference rebinds x: `x = attn_dropout(x) + x` with x == attn output.
    # Dropout is identity in eval -> exactly 2 * attn_out (no skip from pre-norm x).
    x = attn_out + attn_out

    # ---- norm2 -> MLP (Linear -> Dropout(id) -> LeakyReLU -> Linear) ----
    h2 = layer_norm(x, ln2_g, ln2_b)
    m = jnp.dot(h2.astype(cdt), w1[...],
                preferred_element_type=jnp.float32) + b1[...]
    m = jnp.where(m >= 0, m, neg_slope * m)                  # LeakyReLU(0.01), f32
    m = jnp.dot(m.astype(cdt), w2[...],
                preferred_element_type=jnp.float32) + b2[...]

    # `x = mlp_dropout(x) + x` with x == mlp output -> 2 * mlp_out.
    x = m + m

    x_state[...] = x                                         # carry to next layer

    # Only the final layer's activations ever reach HBM: skip reshape/cast/store on
    # every non-final layer (review item 8).
    @pl.when(layer == pl.num_programs(1) - 1)
    def _():
        y_ref[...] = x.reshape(bt, S, D).astype(y_ref.dtype)


def encoder_stack(x, params, num_heads, n_layers, *, batch_tile=None,
                  compute_dtype=jnp.bfloat16, attn_weights_dtype=jnp.float32):
    """All encoder layers in one pallas_call.

    Returns (y (B,S,D), [attn_l (B,H,S,S) for each layer]).
    Set attn_weights_dtype=jnp.bfloat16 to halve attention-probability HBM/VMEM traffic
    (review item 6) when bit-faithful weights are not required.
    """
    B, S, D = x.shape
    H = num_heads
    hd = D // H
    assert D % H == 0
    bt = B if batch_tile is None else batch_tile
    assert B % bt == 0
    num_bt = B // bt
    S_sq = S * S
    scale = 1.0 / math.sqrt(hd)
    cdt = compute_dtype

    # Pack QKV and fold the 1/sqrt(hd) score scale into the Q projection (free).
    wqkv = jnp.concatenate([params["wq"] * scale, params["wk"], params["wv"]],
                           axis=1).astype(cdt)               # (D, 3D) bf16
    bqkv = jnp.concatenate([params["bq"] * scale, params["bk"], params["bv"]],
                           axis=1).astype(jnp.float32)       # (1, 3D) f32

    weights = [
        params["ln1_g"].astype(jnp.float32), params["ln1_b"].astype(jnp.float32),
        wqkv, bqkv,
        params["wo"].astype(cdt), params["bo"].astype(jnp.float32),
        params["ln2_g"].astype(jnp.float32), params["ln2_b"].astype(jnp.float32),
        params["w1"].astype(cdt), params["b1"].astype(jnp.float32),
        params["w2"].astype(cdt), params["b2"].astype(jnp.float32),
    ]

    in_specs = [pl.BlockSpec((bt, S, D), lambda b, l: (b, 0, 0))]
    # Weights are shared by every layer (same modules reused in the PyTorch loop):
    # constant-index blocks, fetched once and kept resident.
    # TODO(synk): on v7x (64 MiB VMEM), consider pipeline_mode=pl.Buffered(1) for these
    # constant-index weight blocks to avoid double-buffering them (review item 9).
    for w in weights:
        in_specs.append(pl.BlockSpec(w.shape, lambda b, l: (0, 0)))

    out_shape = (jax.ShapeDtypeStruct((B, S, D), x.dtype),
                 jax.ShapeDtypeStruct((n_layers, B, H, S_sq), attn_weights_dtype))
    out_specs = (pl.BlockSpec((bt, S, D), lambda b, l: (b, 0, 0)),
                 pl.BlockSpec((1, bt, H, S_sq), lambda b, l: (l, b, 0, 0)))

    # Explicit VMEM budget (defaults are 16/32 MiB scoped; physical is 128/128/64 MiB).
    def isz(dt):
        return jnp.dtype(dt).itemsize

    r = params["w1"].shape[1] // D
    blk_bytes = 2 * (bt * S * D * isz(x.dtype)                      # x block (2-buf)
                     + bt * S * D * isz(x.dtype)                    # y block
                     + bt * H * S_sq * isz(attn_weights_dtype))     # attn block
    w_bytes = 2 * sum(int(w.size) * isz(w.dtype) for w in weights)
    interm_bytes = bt * S * D * 4 * (8 + 2 * r) + 2 * bt * H * S_sq * 4
    state_bytes = bt * S * D * 4
    est = blk_bytes + w_bytes + state_bytes + interm_bytes
    vmem_limit = int(min(max(2 * est, 32 * 2 ** 20), 128 * 2 ** 20))

    kernel = functools.partial(_encoder_stack_kernel, num_heads=H, compute_dtype=cdt)
    y, attn = pl.pallas_call(
        kernel,
        grid=(num_bt, n_layers),
        in_specs=in_specs,
        out_specs=out_specs,
        out_shape=out_shape,
        scratch_shapes=[pltpu.VMEM((bt * S, D), jnp.float32)],   # resident activations
        compiler_params=pltpu.CompilerParams(
            dimension_semantics=("parallel", "arbitrary"),       # batch tiles // layers
            vmem_limit_bytes=vmem_limit),
    )(x, *weights)

    # (L, B, H, S*S) -> list of per-layer (B, H, S, S), matching torch's attn_weights.
    attn = attn.reshape(n_layers, B, H, S, S).astype(jnp.float32)
    return y, [attn[l] for l in range(n_layers)]


def sinusoidal_pe(max_len, d):
    pos = jnp.arange(max_len, dtype=jnp.float32)[:, None]
    i = jnp.arange(0, d, 2, dtype=jnp.float32)
    div = jnp.exp(-i * (math.log(10000.0) / d))
    pe = jnp.zeros((max_len, d), jnp.float32)
    pe = pe.at[:, 0::2].set(jnp.sin(pos * div))
    pe = pe.at[:, 1::2].set(jnp.cos(pos * div))
    return pe


def init_params(key, vocab_size, d, r):
    # NOTE: the PyTorch module has ONE attn / mlp / norm1 / norm2 shared by all layers.
    ks = jax.random.split(key, 13)
    embed = jax.random.normal(ks[0], (vocab_size, d), jnp.float32) * 0.02

    def lin(k, fi, fo):
        return jax.random.normal(k, (fi, fo), jnp.float32) * (1.0 / math.sqrt(fi))

    def bias(k, n):
        return jax.random.normal(k, (1, n), jnp.float32) * 0.01

    params = dict(
        ln1_g=jnp.ones((1, d), jnp.float32), ln1_b=jnp.zeros((1, d), jnp.float32),
        wq=lin(ks[1], d, d), bq=bias(ks[2], d),
        wk=lin(ks[3], d, d), bk=bias(ks[4], d),
        wv=lin(ks[5], d, d), bv=bias(ks[6], d),
        wo=lin(ks[7], d, d), bo=bias(ks[8], d),
        ln2_g=jnp.ones((1, d), jnp.float32), ln2_b=jnp.zeros((1, d), jnp.float32),
        w1=lin(ks[9], d, r * d), b1=bias(ks[10], r * d),
        w2=lin(ks[11], r * d, d), b2=bias(ks[12], d),
    )
    return embed, params


def transformer_encoder_forward(tokens, embed, pe_table, params, num_heads, n_layers,
                                batch_tile=None):
    # TODO(synk): EmbeddingWithPE source not provided; assumed nn.Embedding + fixed
    # sinusoidal PE add (kept in plain JAX: the token gather is best left to XLA).
    B, S = tokens.shape
    x = embed[tokens] + pe_table[:S][None, :, :]              # (B, S, D) f32
    return encoder_stack(x, params, num_heads, n_layers, batch_tile=batch_tile)


if __name__ == "__main__":
    # Small config consistent with the module's __init__ signature (smoke test; real
    # deployments should use D, S that are multiples of 128 — review item 11).
    n_layers, vocab_size, embed_dim, num_heads, max_len, r = 2, 50, 32, 4, 16, 2
    B, S = 2, 8

    key = jax.random.PRNGKey(0)
    k_tok, k_par = jax.random.split(key)
    tokens = jax.random.randint(k_tok, (B, S), 0, vocab_size, dtype=jnp.int32)

    embed, params = init_params(k_par, vocab_size, embed_dim, r)
    pe_table = sinusoidal_pe(max_len, embed_dim)

    out, attn_weights = transformer_encoder_forward(
        tokens, embed, pe_table, params, num_heads, n_layers, batch_tile=1)
    out = jax.block_until_ready(out)
    attn_weights = [jax.block_until_ready(a) for a in attn_weights]

    assert out.shape == (B, S, embed_dim)
    assert len(attn_weights) == n_layers
    assert attn_weights[0].shape == (B, num_heads, S, S)
    assert bool(jnp.all(jnp.isfinite(out)))
    # Softmax rows must sum to ~1 (exact reciprocal is used for the denominator).
    assert bool(jnp.allclose(jnp.sum(attn_weights[0], axis=-1), 1.0, atol=1e-3))
    print("KERNEL_OK")
</pallas_src>

<mosaic_0001>
module attributes {stable_mosaic.version = 11 : i64} {
  func.func @_encoder_stack_kernel(%arg0: i32, %arg1: i32, %arg2: memref<1x8x32xf32, #tpu.memory_space<vmem>>, %arg3: memref<1x32xf32, #tpu.memory_space<vmem>>, %arg4: memref<1x32xf32, #tpu.memory_space<vmem>>, %arg5: memref<32x96xbf16, #tpu.memory_space<vmem>>, %arg6: memref<1x96xf32, #tpu.memory_space<vmem>>, %arg7: memref<32x32xbf16, #tpu.memory_space<vmem>>, %arg8: memref<1x32xf32, #tpu.memory_space<vmem>>, %arg9: memref<1x32xf32, #tpu.memory_space<vmem>>, %arg10: memref<1x32xf32, #tpu.memory_space<vmem>>, %arg11: memref<32x64xbf16, #tpu.memory_space<vmem>>, %arg12: memref<1x64xf32, #tpu.memory_space<vmem>>, %arg13: memref<64x32xbf16, #tpu.memory_space<vmem>>, %arg14: memref<1x32xf32, #tpu.memory_space<vmem>>, %arg15: memref<1x8x32xf32, #tpu.memory_space<vmem>>, %arg16: memref<1x1x4x64xf32, #tpu.memory_space<vmem>>, %arg17: memref<8x32xf32, #tpu.memory_space<vmem>>) attributes {dimension_semantics = [#tpu.dimension_semantics<parallel>, #tpu.dimension_semantics<arbitrary>], iteration_bounds = array<i64: 2, 2>, scalar_prefetch = 0 : i64, scratch_operands = 1 : i64, tpu.core_type = #tpu.core_type<tc>, window_params = [{transform_indices = @transform_0, window_bounds = array<i64: 1, 8, 32>}, {pipeline_mode = #tpu.pipeline_mode<synchronous>, transform_indices = @transform_1, window_bounds = array<i64: 1, 32>}, {pipeline_mode = #tpu.pipeline_mode<synchronous>, transform_indices = @transform_2, window_bounds = array<i64: 1, 32>}, {pipeline_mode = #tpu.pipeline_mode<synchronous>, transform_indices = @transform_3, window_bounds = array<i64: 32, 96>}, {pipeline_mode = #tpu.pipeline_mode<synchronous>, transform_indices = @transform_4, window_bounds = array<i64: 1, 96>}, {pipeline_mode = #tpu.pipeline_mode<synchronous>, transform_indices = @transform_5, window_bounds = array<i64: 32, 32>}, {pipeline_mode = #tpu.pipeline_mode<synchronous>, transform_indices = @transform_6, window_bounds = array<i64: 1, 32>}, {pipeline_mode = #tpu.pipeline_mode<synchronous>, transform_indices = @transform_7, window_bounds = array<i64: 1, 32>}, {pipeline_mode = #tpu.pipeline_mode<synchronous>, transform_indices = @transform_8, window_bounds = array<i64: 1, 32>}, {pipeline_mode = #tpu.pipeline_mode<synchronous>, transform_indices = @transform_9, window_bounds = array<i64: 32, 64>}, {pipeline_mode = #tpu.pipeline_mode<synchronous>, transform_indices = @transform_10, window_bounds = array<i64: 1, 64>}, {pipeline_mode = #tpu.pipeline_mode<synchronous>, transform_indices = @transform_11, window_bounds = array<i64: 64, 32>}, {pipeline_mode = #tpu.pipeline_mode<synchronous>, transform_indices = @transform_12, window_bounds = array<i64: 1, 32>}, {transform_indices = @transform_13, window_bounds = array<i64: 1, 8, 32>}, {transform_indices = @transform_14, window_bounds = array<i64: 1, 1, 4, 64>}]} {
    %c0_i32 = arith.constant 0 : i32
    %0 = arith.cmpi eq, %arg1, %c0_i32 : i32
    %1 = arith.extui %0 : i1 to i32
    %c0_i32_0 = arith.constant 0 : i32
    %2 = arith.cmpi ne, %1, %c0_i32_0 : i32
    scf.if %2 {
      %c0_52 = arith.constant 0 : index
      %c0_53 = arith.constant 0 : index
      %c0_54 = arith.constant 0 : index
      %142 = vector.load %arg2[%c0_52, %c0_53, %c0_54] : memref<1x8x32xf32, #tpu.memory_space<vmem>>, vector<1x8x32xf32>
      %143 = vector.shape_cast %142 : vector<1x8x32xf32> to vector<8x32xf32>
      %c0_55 = arith.constant 0 : index
      %c0_56 = arith.constant 0 : index
      %144 = vector.load %arg17[%c0_55, %c0_56] : memref<8x32xf32, #tpu.memory_space<vmem>>, vector<8x32xf32>
      tpu.vector_store %arg17[%c0_55, %c0_56], %143 {strides = array<i32>} : memref<8x32xf32, #tpu.memory_space<vmem>>, vector<8x32xf32>,
    } else {
    }
    %c0 = arith.constant 0 : index
    %c0_1 = arith.constant 0 : index
    %3 = vector.load %arg17[%c0, %c0_1] : memref<8x32xf32, #tpu.memory_space<vmem>>, vector<8x32xf32>
    %cst = arith.constant dense<0.000000e+00> : vector<8xf32>
    %4 = vector.multi_reduction <add>, %3, %cst [1] : vector<8x32xf32> to vector<8xf32>
    %5 = vector.shape_cast %4 : vector<8xf32> to vector<8x1xf32>
    %cst_2 = arith.constant 3.200000e+01 : f32
    %6 = vector.broadcast %cst_2 : f32 to vector<8x1xf32>
    %7 = arith.divf %5, %6 : vector<8x1xf32>
    %8 = vector.broadcast %7 : vector<8x1xf32> to vector<8x32xf32>
    %9 = arith.subf %3, %8 : vector<8x32xf32>
    %10 = arith.mulf %9, %9 : vector<8x32xf32>
    %cst_3 = arith.constant dense<0.000000e+00> : vector<8xf32>
    %11 = vector.multi_reduction <add>, %10, %cst_3 [1] : vector<8x32xf32> to vector<8xf32>
    %12 = vector.shape_cast %11 : vector<8xf32> to vector<8x1xf32>
    %cst_4 = arith.constant 3.200000e+01 : f32
    %13 = vector.broadcast %cst_4 : f32 to vector<8x1xf32>
    %14 = arith.divf %12, %13 : vector<8x1xf32>
    %cst_5 = arith.constant 9.99999974E-6 : f32
    %15 = vector.broadcast %cst_5 : f32 to vector<8x1xf32>
    %16 = arith.addf %14, %15 : vector<8x1xf32>
    %17 = math.rsqrt %16 : vector<8x1xf32>
    %18 = vector.broadcast %17 : vector<8x1xf32> to vector<8x32xf32>
    %19 = arith.mulf %9, %18 : vector<8x32xf32>
    %c0_6 = arith.constant 0 : index
    %c0_7 = arith.constant 0 : index
    %20 = vector.load %arg3[%c0_6, %c0_7] : memref<1x32xf32, #tpu.memory_space<vmem>>, vector<1x32xf32>
    %21 = vector.broadcast %20 : vector<1x32xf32> to vector<8x32xf32>
    %22 = arith.mulf %19, %21 : vector<8x32xf32>
    %c0_8 = arith.constant 0 : index
    %c0_9 = arith.constant 0 : index
    %23 = vector.load %arg4[%c0_8, %c0_9] : memref<1x32xf32, #tpu.memory_space<vmem>>, vector<1x32xf32>
    %24 = vector.broadcast %23 : vector<1x32xf32> to vector<8x32xf32>
    %25 = arith.addf %22, %24 : vector<8x32xf32>
    %26 = arith.truncf %25 : vector<8x32xf32> to vector<8x32xbf16>
    %c0_10 = arith.constant 0 : index
    %c0_11 = arith.constant 0 : index
    %27 = vector.load %arg5[%c0_10, %c0_11] : memref<32x96xbf16, #tpu.memory_space<vmem>>, vector<32x96xbf16>
    %cst_12 = arith.constant dense<0.000000e+00> : vector<8x96xf32>
    %28 = tpu.matmul %26, %27, %cst_12 {dimension_numbers = #tpu.dot_dimension_numbers<[1], [0], [0], [1], [0, 0, 1, 1], [], []>} : vector<8x32xbf16>, vector<32x96xbf16>, vector<8x96xf32> -> vector<8x96xf32>
    %c0_13 = arith.constant 0 : index
    %c0_14 = arith.constant 0 : index
    %29 = vector.load %arg6[%c0_13, %c0_14] : memref<1x96xf32, #tpu.memory_space<vmem>>, vector<1x96xf32>
    %30 = vector.broadcast %29 : vector<1x96xf32> to vector<8x96xf32>
    %31 = arith.addf %28, %30 : vector<8x96xf32>
    %32 = vector.extract_strided_slice %31 {offsets = [0, 0], sizes = [8, 8], strides = [1, 1]} : vector<8x96xf32> to vector<8x8xf32>
    %33 = vector.shape_cast %32 : vector<8x8xf32> to vector<1x1x8x8xf32>
    %34 = vector.extract_strided_slice %31 {offsets = [0, 8], sizes = [8, 8], strides = [1, 1]} : vector<8x96xf32> to vector<8x8xf32>
    %35 = vector.shape_cast %34 : vector<8x8xf32> to vector<1x1x8x8xf32>
    %36 = vector.extract_strided_slice %31 {offsets = [0, 16], sizes = [8, 8], strides = [1, 1]} : vector<8x96xf32> to vector<8x8xf32>
    %37 = vector.shape_cast %36 : vector<8x8xf32> to vector<1x1x8x8xf32>
    %38 = vector.extract_strided_slice %31 {offsets = [0, 24], sizes = [8, 8], strides = [1, 1]} : vector<8x96xf32> to vector<8x8xf32>
    %39 = vector.shape_cast %38 : vector<8x8xf32> to vector<1x1x8x8xf32>
    %40 = tpu.concatenate %33, %35, %37, %39 in 1 : vector<1x1x8x8xf32>, vector<1x1x8x8xf32>, vector<1x1x8x8xf32>, vector<1x1x8x8xf32> -> vector<1x4x8x8xf32>
    %41 = vector.shape_cast %40 : vector<1x4x8x8xf32> to vector<4x8x8xf32>
    %42 = arith.truncf %41 : vector<4x8x8xf32> to vector<4x8x8xbf16>
    %43 = vector.extract_strided_slice %31 {offsets = [0, 32], sizes = [8, 8], strides = [1, 1]} : vector<8x96xf32> to vector<8x8xf32>
    %44 = vector.shape_cast %43 : vector<8x8xf32> to vector<1x1x8x8xf32>
    %45 = vector.extract_strided_slice %31 {offsets = [0, 40], sizes = [8, 8], strides = [1, 1]} : vector<8x96xf32> to vector<8x8xf32>
    %46 = vector.shape_cast %45 : vector<8x8xf32> to vector<1x1x8x8xf32>
    %47 = vector.extract_strided_slice %31 {offsets = [0, 48], sizes = [8, 8], strides = [1, 1]} : vector<8x96xf32> to vector<8x8xf32>
    %48 = vector.shape_cast %47 : vector<8x8xf32> to vector<1x1x8x8xf32>
    %49 = vector.extract_strided_slice %31 {offsets = [0, 56], sizes = [8, 8], strides = [1, 1]} : vector<8x96xf32> to vector<8x8xf32>
    %50 = vector.shape_cast %49 : vector<8x8xf32> to vector<1x1x8x8xf32>
    %51 = tpu.concatenate %44, %46, %48, %50 in 1 : vector<1x1x8x8xf32>, vector<1x1x8x8xf32>, vector<1x1x8x8xf32>, vector<1x1x8x8xf32> -> vector<1x4x8x8xf32>
    %52 = vector.shape_cast %51 : vector<1x4x8x8xf32> to vector<4x8x8xf32>
    %53 = arith.truncf %52 : vector<4x8x8xf32> to vector<4x8x8xbf16>
    %54 = vector.extract_strided_slice %31 {offsets = [0, 64], sizes = [8, 8], strides = [1, 1]} : vector<8x96xf32> to vector<8x8xf32>
    %55 = vector.shape_cast %54 : vector<8x8xf32> to vector<1x1x8x8xf32>
    %56 = vector.extract_strided_slice %31 {offsets = [0, 72], sizes = [8, 8], strides = [1, 1]} : vector<8x96xf32> to vector<8x8xf32>
    %57 = vector.shape_cast %56 : vector<8x8xf32> to vector<1x1x8x8xf32>
    %58 = vector.extract_strided_slice %31 {offsets = [0, 80], sizes = [8, 8], strides = [1, 1]} : vector<8x96xf32> to vector<8x8xf32>
    %59 = vector.shape_cast %58 : vector<8x8xf32> to vector<1x1x8x8xf32>
    %60 = vector.extract_strided_slice %31 {offsets = [0, 88], sizes = [8, 8], strides = [1, 1]} : vector<8x96xf32> to vector<8x8xf32>
    %61 = vector.shape_cast %60 : vector<8x8xf32> to vector<1x1x8x8xf32>
    %62 = tpu.concatenate %55, %57, %59, %61 in 1 : vector<1x1x8x8xf32>, vector<1x1x8x8xf32>, vector<1x1x8x8xf32>, vector<1x1x8x8xf32> -> vector<1x4x8x8xf32>
    %63 = vector.shape_cast %62 : vector<1x4x8x8xf32> to vector<4x8x8xf32>
    %64 = arith.truncf %63 : vector<4x8x8xf32> to vector<4x8x8xbf16>
    "tpu.trace_start"() <{level = 10 : i32, message = "nqd,nkd->nqk"}> : () -> ()
    %cst_15 = arith.constant dense<0.000000e+00> : vector<4x8x8xf32>
    %65 = tpu.matmul %42, %53, %cst_15 {dimension_numbers = #tpu.dot_dimension_numbers<[2], [2], [1], [1], [0, 0, 0, 1, 1, 1], [0], [0]>} : vector<4x8x8xbf16>, vector<4x8x8xbf16>, vector<4x8x8xf32> -> vector<4x8x8xf32>
    "tpu.trace_stop"() : () -> ()
    %cst_16 = arith.constant dense<0xFF800000> : vector<4x8xf32>
    %66 = vector.multi_reduction <maximumf>, %65, %cst_16 [2] : vector<4x8x8xf32> to vector<4x8xf32>
    %67 = vector.shape_cast %66 : vector<4x8xf32> to vector<4x8x1xf32>
    %68 = vector.broadcast %67 : vector<4x8x1xf32> to vector<4x8x8xf32>
    %69 = arith.subf %65, %68 : vector<4x8x8xf32>
    %70 = math.exp %69 : vector<4x8x8xf32>
    %cst_17 = arith.constant dense<0.000000e+00> : vector<4x8xf32>
    %71 = vector.multi_reduction <add>, %70, %cst_17 [2] : vector<4x8x8xf32> to vector<4x8xf32>
    %72 = vector.shape_cast %71 : vector<4x8xf32> to vector<4x8x1xf32>
    %73 = tpu.reciprocal %72 : vector<4x8x1xf32> -> vector<4x8x1xf32>
    %74 = vector.broadcast %73 : vector<4x8x1xf32> to vector<4x8x8xf32>
    %75 = arith.mulf %70, %74 : vector<4x8x8xf32>
    %76 = vector.shape_cast %75 : vector<4x8x8xf32> to vector<1x1x4x64xf32>
    %c0_18 = arith.constant 0 : index
    %c0_19 = arith.constant 0 : index
    %c0_20 = arith.constant 0 : index
    %c0_21 = arith.constant 0 : index
    %77 = vector.load %arg16[%c0_18, %c0_19, %c0_20, %c0_21] : memref<1x1x4x64xf32, #tpu.memory_space<vmem>>, vector<1x1x4x64xf32>
    tpu.vector_store %arg16[%c0_18, %c0_19, %c0_20, %c0_21], %76 {strides = array<i32>} : memref<1x1x4x64xf32, #tpu.memory_space<vmem>>, vector<1x1x4x64xf32>,
    %78 = arith.truncf %75 : vector<4x8x8xf32> to vector<4x8x8xbf16>
    "tpu.trace_start"() <{level = 10 : i32, message = "nqk,nkd->nqd"}> : () -> ()
    %cst_22 = arith.constant dense<0.000000e+00> : vector<4x8x8xf32>
    %79 = tpu.matmul %78, %64, %cst_22 {dimension_numbers = #tpu.dot_dimension_numbers<[2], [1], [1], [2], [0, 0, 0, 1, 1, 2], [0], [0]>} : vector<4x8x8xbf16>, vector<4x8x8xbf16>, vector<4x8x8xf32> -> vector<4x8x8xf32>
    "tpu.trace_stop"() : () -> ()
    %80 = vector.shape_cast %79 : vector<4x8x8xf32> to vector<1x4x8x8xf32>
    %81 = vector.extract_strided_slice %80 {offsets = [0, 0, 0, 0], sizes = [1, 1, 8, 8], strides = [1, 1, 1, 1]} : vector<1x4x8x8xf32> to vector<1x1x8x8xf32>
    %82 = vector.shape_cast %81 : vector<1x1x8x8xf32> to vector<1x8x8xf32>
    %83 = vector.extract_strided_slice %80 {offsets = [0, 1, 0, 0], sizes = [1, 1, 8, 8], strides = [1, 1, 1, 1]} : vector<1x4x8x8xf32> to vector<1x1x8x8xf32>
    %84 = vector.shape_cast %83 : vector<1x1x8x8xf32> to vector<1x8x8xf32>
    %85 = vector.extract_strided_slice %80 {offsets = [0, 2, 0, 0], sizes = [1, 1, 8, 8], strides = [1, 1, 1, 1]} : vector<1x4x8x8xf32> to vector<1x1x8x8xf32>
    %86 = vector.shape_cast %85 : vector<1x1x8x8xf32> to vector<1x8x8xf32>
    %87 = vector.extract_strided_slice %80 {offsets = [0, 3, 0, 0], sizes = [1, 1, 8, 8], strides = [1, 1, 1, 1]} : vector<1x4x8x8xf32> to vector<1x1x8x8xf32>
    %88 = vector.shape_cast %87 : vector<1x1x8x8xf32> to vector<1x8x8xf32>
    %89 = tpu.concatenate %82, %84, %86, %88 in 2 : vector<1x8x8xf32>, vector<1x8x8xf32>, vector<1x8x8xf32>, vector<1x8x8xf32> -> vector<1x8x32xf32>
    %90 = vector.shape_cast %89 : vector<1x8x32xf32> to vector<8x32xf32>
    %91 = arith.truncf %90 : vector<8x32xf32> to vector<8x32xbf16>
    %c0_23 = arith.constant 0 : index
    %c0_24 = arith.constant 0 : index
    %92 = vector.load %arg7[%c0_23, %c0_24] : memref<32x32xbf16, #tpu.memory_space<vmem>>, vector<32x32xbf16>
    %cst_25 = arith.constant dense<0.000000e+00> : vector<8x32xf32>
    %93 = tpu.matmul %91, %92, %cst_25 {dimension_numbers = #tpu.dot_dimension_numbers<[1], [0], [0], [1], [0, 0, 1, 1], [], []>} : vector<8x32xbf16>, vector<32x32xbf16>, vector<8x32xf32> -> vector<8x32xf32>
    %c0_26 = arith.constant 0 : index
    %c0_27 = arith.constant 0 : index
    %94 = vector.load %arg8[%c0_26, %c0_27] : memref<1x32xf32, #tpu.memory_space<vmem>>, vector<1x32xf32>
    %95 = vector.broadcast %94 : vector<1x32xf32> to vector<8x32xf32>
    %96 = arith.addf %93, %95 : vector<8x32xf32>
    %97 = arith.addf %96, %96 : vector<8x32xf32>
    %cst_28 = arith.constant dense<0.000000e+00> : vector<8xf32>
    %98 = vector.multi_reduction <add>, %97, %cst_28 [1] : vector<8x32xf32> to vector<8xf32>
    %99 = vector.shape_cast %98 : vector<8xf32> to vector<8x1xf32>
    %cst_29 = arith.constant 3.200000e+01 : f32
    %100 = vector.broadcast %cst_29 : f32 to vector<8x1xf32>
    %101 = arith.divf %99, %100 : vector<8x1xf32>
    %102 = vector.broadcast %101 : vector<8x1xf32> to vector<8x32xf32>
    %103 = arith.subf %97, %102 : vector<8x32xf32>
    %104 = arith.mulf %103, %103 : vector<8x32xf32>
    %cst_30 = arith.constant dense<0.000000e+00> : vector<8xf32>
    %105 = vector.multi_reduction <add>, %104, %cst_30 [1] : vector<8x32xf32> to vector<8xf32>
    %106 = vector.shape_cast %105 : vector<8xf32> to vector<8x1xf32>
    %cst_31 = arith.constant 3.200000e+01 : f32
    %107 = vector.broadcast %cst_31 : f32 to vector<8x1xf32>
    %108 = arith.divf %106, %107 : vector<8x1xf32>
    %cst_32 = arith.constant 9.99999974E-6 : f32
    %109 = vector.broadcast %cst_32 : f32 to vector<8x1xf32>
    %110 = arith.addf %108, %109 : vector<8x1xf32>
    %111 = math.rsqrt %110 : vector<8x1xf32>
    %112 = vector.broadcast %111 : vector<8x1xf32> to vector<8x32xf32>
    %113 = arith.mulf %103, %112 : vector<8x32xf32>
    %c0_33 = arith.constant 0 : index
    %c0_34 = arith.constant 0 : index
    %114 = vector.load %arg9[%c0_33, %c0_34] : memref<1x32xf32, #tpu.memory_space<vmem>>, vector<1x32xf32>
    %115 = vector.broadcast %114 : vector<1x32xf32> to vector<8x32xf32>
    %116 = arith.mulf %113, %115 : vector<8x32xf32>
    %c0_35 = arith.constant 0 : index
    %c0_36 = arith.constant 0 : index
    %117 = vector.load %arg10[%c0_35, %c0_36] : memref<1x32xf32, #tpu.memory_space<vmem>>, vector<1x32xf32>
    %118 = vector.broadcast %117 : vector<1x32xf32> to vector<8x32xf32>
    %119 = arith.addf %116, %118 : vector<8x32xf32>
    %120 = arith.truncf %119 : vector<8x32xf32> to vector<8x32xbf16>
    %c0_37 = arith.constant 0 : index
    %c0_38 = arith.constant 0 : index
    %121 = vector.load %arg11[%c0_37, %c0_38] : memref<32x64xbf16, #tpu.memory_space<vmem>>, vector<32x64xbf16>
    %cst_39 = arith.constant dense<0.000000e+00> : vector<8x64xf32>
    %122 = tpu.matmul %120, %121, %cst_39 {dimension_numbers = #tpu.dot_dimension_numbers<[1], [0], [0], [1], [0, 0, 1, 1], [], []>} : vector<8x32xbf16>, vector<32x64xbf16>, vector<8x64xf32> -> vector<8x64xf32>
    %c0_40 = arith.constant 0 : index
    %c0_41 = arith.constant 0 : index
    %123 = vector.load %arg12[%c0_40, %c0_41] : memref<1x64xf32, #tpu.memory_space<vmem>>, vector<1x64xf32>
    %124 = vector.broadcast %123 : vector<1x64xf32> to vector<8x64xf32>
    %125 = arith.addf %122, %124 : vector<8x64xf32>
    %cst_42 = arith.constant 0.000000e+00 : f32
    %126 = vector.broadcast %cst_42 : f32 to vector<8x64xf32>
    %127 = arith.cmpf oge, %125, %126 : vector<8x64xf32>
    %cst_43 = arith.constant 0.00999999977 : f32
    %128 = vector.broadcast %cst_43 : f32 to vector<8x64xf32>
    %129 = arith.mulf %128, %125 : vector<8x64xf32>
    %130 = arith.select %127, %125, %129 : vector<8x64xi1>, vector<8x64xf32>
    %131 = arith.truncf %130 : vector<8x64xf32> to vector<8x64xbf16>
    %c0_44 = arith.constant 0 : index
    %c0_45 = arith.constant 0 : index
    %132 = vector.load %arg13[%c0_44, %c0_45] : memref<64x32xbf16, #tpu.memory_space<vmem>>, vector<64x32xbf16>
    %cst_46 = arith.constant dense<0.000000e+00> : vector<8x32xf32>
    %133 = tpu.matmul %131, %132, %cst_46 {dimension_numbers = #tpu.dot_dimension_numbers<[1], [0], [0], [1], [0, 0, 1, 1], [], []>} : vector<8x64xbf16>, vector<64x32xbf16>, vector<8x32xf32> -> vector<8x32xf32>
    %c0_47 = arith.constant 0 : index
    %c0_48 = arith.constant 0 : index
    %134 = vector.load %arg14[%c0_47, %c0_48] : memref<1x32xf32, #tpu.memory_space<vmem>>, vector<1x32xf32>
    %135 = vector.broadcast %134 : vector<1x32xf32> to vector<8x32xf32>
    %136 = arith.addf %133, %135 : vector<8x32xf32>
    %137 = arith.addf %136, %136 : vector<8x32xf32>
    %c0_49 = arith.constant 0 : index
    %c0_50 = arith.constant 0 : index
    %138 = vector.load %arg17[%c0_49, %c0_50] : memref<8x32xf32, #tpu.memory_space<vmem>>, vector<8x32xf32>
    tpu.vector_store %arg17[%c0_49, %c0_50], %137 {strides = array<i32>} : memref<8x32xf32, #tpu.memory_space<vmem>>, vector<8x32xf32>,
    %c1_i32 = arith.constant 1 : i32
    %139 = arith.cmpi eq, %arg1, %c1_i32 : i32
    %140 = arith.extui %139 : i1 to i32
    %c0_i32_51 = arith.constant 0 : i32
    %141 = arith.cmpi ne, %140, %c0_i32_51 : i32
    scf.if %141 {
      %142 = vector.shape_cast %137 : vector<8x32xf32> to vector<1x8x32xf32>
      %c0_52 = arith.constant 0 : index
      %c0_53 = arith.constant 0 : index
      %c0_54 = arith.constant 0 : index
      %143 = vector.load %arg15[%c0_52, %c0_53, %c0_54] : memref<1x8x32xf32, #tpu.memory_space<vmem>>, vector<1x8x32xf32>
      tpu.vector_store %arg15[%c0_52, %c0_53, %c0_54], %142 {strides = array<i32>} : memref<1x8x32xf32, #tpu.memory_space<vmem>>, vector<1x8x32xf32>,
    } else {
    }
    return
  }
  func.func @transform_0(%arg0: i32, %arg1: i32) -> (i32, i32, i32) {
    %c0_i32 = arith.constant 0 : i32
    %c0_i32_0 = arith.constant 0 : i32
    %c0_i32_1 = arith.constant 0 : i32
    return %arg0, %c0_i32, %c0_i32_0 : i32, i32, i32
  }
  func.func @transform_1(%arg0: i32, %arg1: i32) -> (i32, i32) {
    %c0_i32 = arith.constant 0 : i32
    %c0_i32_0 = arith.constant 0 : i32
    %c0_i32_1 = arith.constant 0 : i32
    return %c0_i32, %c0_i32_0 : i32, i32
  }
  func.func @transform_2(%arg0: i32, %arg1: i32) -> (i32, i32) {
    %c0_i32 = arith.constant 0 : i32
    %c0_i32_0 = arith.constant 0 : i32
    %c0_i32_1 = arith.constant 0 : i32
    return %c0_i32, %c0_i32_0 : i32, i32
  }
  func.func @transform_3(%arg0: i32, %arg1: i32) -> (i32, i32) {
    %c0_i32 = arith.constant 0 : i32
    %c0_i32_0 = arith.constant 0 : i32
    %c0_i32_1 = arith.constant 0 : i32
    return %c0_i32, %c0_i32_0 : i32, i32
  }
  func.func @transform_4(%arg0: i32, %arg1: i32) -> (i32, i32) {
    %c0_i32 = arith.constant 0 : i32
    %c0_i32_0 = arith.constant 0 : i32
    %c0_i32_1 = arith.constant 0 : i32
    return %c0_i32, %c0_i32_0 : i32, i32
  }
  func.func @transform_5(%arg0: i32, %arg1: i32) -> (i32, i32) {
    %c0_i32 = arith.constant 0 : i32
    %c0_i32_0 = arith.constant 0 : i32
    %c0_i32_1 = arith.constant 0 : i32
    return %c0_i32, %c0_i32_0 : i32, i32
  }
  func.func @transform_6(%arg0: i32, %arg1: i32) -> (i32, i32) {
    %c0_i32 = arith.constant 0 : i32
    %c0_i32_0 = arith.constant 0 : i32
    %c0_i32_1 = arith.constant 0 : i32
    return %c0_i32, %c0_i32_0 : i32, i32
  }
  func.func @transform_7(%arg0: i32, %arg1: i32) -> (i32, i32) {
    %c0_i32 = arith.constant 0 : i32
    %c0_i32_0 = arith.constant 0 : i32
    %c0_i32_1 = arith.constant 0 : i32
    return %c0_i32, %c0_i32_0 : i32, i32
  }
  func.func @transform_8(%arg0: i32, %arg1: i32) -> (i32, i32) {
    %c0_i32 = arith.constant 0 : i32
    %c0_i32_0 = arith.constant 0 : i32
    %c0_i32_1 = arith.constant 0 : i32
    return %c0_i32, %c0_i32_0 : i32, i32
  }
  func.func @transform_9(%arg0: i32, %arg1: i32) -> (i32, i32) {
    %c0_i32 = arith.constant 0 : i32
    %c0_i32_0 = arith.constant 0 : i32
    %c0_i32_1 = arith.constant 0 : i32
    return %c0_i32, %c0_i32_0 : i32, i32
  }
  func.func @transform_10(%arg0: i32, %arg1: i32) -> (i32, i32) {
    %c0_i32 = arith.constant 0 : i32
    %c0_i32_0 = arith.constant 0 : i32
    %c0_i32_1 = arith.constant 0 : i32
    return %c0_i32, %c0_i32_0 : i32, i32
  }
  func.func @transform_11(%arg0: i32, %arg1: i32) -> (i32, i32) {
    %c0_i32 = arith.constant 0 : i32
    %c0_i32_0 = arith.constant 0 : i32
    %c0_i32_1 = arith.constant 0 : i32
    return %c0_i32, %c0_i32_0 : i32, i32
  }
  func.func @transform_12(%arg0: i32, %arg1: i32) -> (i32, i32) {
    %c0_i32 = arith.constant 0 : i32
    %c0_i32_0 = arith.constant 0 : i32
    %c0_i32_1 = arith.constant 0 : i32
    return %c0_i32, %c0_i32_0 : i32, i32
  }
  func.func @transform_13(%arg0: i32, %arg1: i32) -> (i32, i32, i32) {
    %c0_i32 = arith.constant 0 : i32
    %c0_i32_0 = arith.constant 0 : i32
    %c0_i32_1 = arith.constant 0 : i32
    return %arg0, %c0_i32, %c0_i32_0 : i32, i32, i32
  }
  func.func @transform_14(%arg0: i32, %arg1: i32) -> (i32, i32, i32, i32) {
    %c0_i32 = arith.constant 0 : i32
    %c0_i32_0 = arith.constant 0 : i32
    %c0_i32_1 = arith.constant 0 : i32
    return %arg1, %arg0, %c0_i32, %c0_i32_0 : i32, i32, i32, i32
  }
}

</mosaic_0001>

<llo_original>
// kernel: tpu_custom_call.1
$region0: #{tpu_custom_call.1}
  #allocation0 [shape = 'u32[]', space=smem, size = 0x4, offset = 0x4, fixed_abs, tag = 'smem constant byte address 0x4 - core index']
  #allocation1 [shape = 'u32[144,128]{1,0:T(1,128)}', space=vmem, size = 0x12000, scoped, tag = 'internal scratch']
  #allocation2 [shape = 'f32[8,32]{1,0:T(8,128)}', space=vmem, size = 0x1000, scoped, tag = 'scratch operand']
  %s0 = inlined_call_operand.vmem [shape: f32[2,8,32], index: 0, kind: input, shape index: {}]
  %s1 = inlined_call_operand.hbm [shape: f32[1,32], index: 1, kind: input, shape index: {}]
  %s2 = inlined_call_operand.hbm [shape: f32[1,32], index: 2, kind: input, shape index: {}]
  %s3 = inlined_call_operand.vmem [shape: bf16[32,96], index: 3, kind: input, shape index: {}]
  %s4 = inlined_call_operand.hbm [shape: f32[1,96], index: 4, kind: input, shape index: {}]
  %s5 = inlined_call_operand.vmem [shape: bf16[32,32], index: 5, kind: input, shape index: {}]
  %s6 = inlined_call_operand.hbm [shape: f32[1,32], index: 6, kind: input, shape index: {}]
  %s7 = inlined_call_operand.hbm [shape: f32[1,32], index: 7, kind: input, shape index: {}]
  %s8 = inlined_call_operand.hbm [shape: f32[1,32], index: 8, kind: input, shape index: {}]
  %s9 = inlined_call_operand.vmem [shape: bf16[32,64], index: 9, kind: input, shape index: {}]
  %s10 = inlined_call_operand.vmem [shape: f32[1,64], index: 10, kind: input, shape index: {}]
  %s11 = inlined_call_operand.vmem [shape: bf16[64,32], index: 11, kind: input, shape index: {}]
  %s12 = inlined_call_operand.vmem [shape: f32[1,32], index: 12, kind: input, shape index: {}]
  %s13 = inlined_call_operand.hbm [shape: f32[2,8,32], index: 13, kind: output, shape index: {0}]
  %s14 = inlined_call_operand.hbm [shape: f32[2,2,4,64], index: 14, kind: output, shape index: {1}]
  %15 = xla_tuple %s13, %s14
  %s16 = sld [smem:[#allocation0]]
  $region125: #{tpu_custom_call.1} parent=0
    _
  %s18 = ssub.s32 1, %s16
  %s19 = scalar_select 0, %s18, %s16
  $region1: #{tpu_custom_call.1} parent=0
    #allocation3 [shape = 'u8[512]{0}', space=vmem, size = 0x400, scoped, tag = 'input window, operand 1, single buffered']
    #allocation4 [shape = 's32[2]{0}', space=sflag, size = 0x8, scoped, tag = 'scoped memory for tpu_custom_call.1']
    #allocation5 [shape = 's32[2]{0}', space=sflag, size = 0x8, scoped, tag = 'scoped memory for tpu_custom_call.1']
    #allocation6 [shape = 'u8[512]{0}', space=vmem, size = 0x400, scoped, tag = 'input window, operand 2, single buffered']
    #allocation7 [shape = 's32[1]{0}', space=sflag, size = 0x4, scoped, tag = 'scoped memory for tpu_custom_call.1']
    #allocation8 [shape = 'u8[512]{0}', space=vmem, size = 0x400, scoped, tag = 'input window, operand 4, single buffered']
    #allocation9 [shape = 'u8[512]{0}', space=vmem, size = 0x400, scoped, tag = 'input window, operand 6, single buffered']
    #allocation10 [shape = 's32[1]{0}', space=sflag, size = 0x4, scoped, tag = 'scoped memory for tpu_custom_call.1']
    #allocation11 [shape = 'u8[512]{0}', space=vmem, size = 0x400, scoped, tag = 'input window, operand 7, single buffered']
    #allocation12 [shape = 'u8[512]{0}', space=vmem, size = 0x400, scoped, tag = 'input window, operand 8, single buffered']
    #allocation13 [shape = 's32[1]{0}', space=sflag, size = 0x4, scoped, tag = 'scoped memory for tpu_custom_call.1']
    #allocation14 [shape = 'u8[8192]{0}', space=vmem, size = 0x2000, scoped, tag = 'output window, operand 0']
    #allocation15 [shape = 'u8[4096]{0}', space=vmem, size = 0x1000, scoped, tag = 'output window, operand 1']
    #allocation16 [shape = 's32[2]{0}', space=sflag, size = 0x8, scoped, tag = 'scoped memory for tpu_custom_call.1']
    %20 = vsyncpa [#allocation4], 0
    %21 = vsyncpa [#allocation7], 0
    %22 = vsyncpa [#allocation10], 0
    %23 = vsyncpa [#allocation13], 0
    %24 = vsyncpa [#allocation5], 0
    %s25 = scalar_lea.sflag [#allocation5], 1
    %26 = vsyncpa %s25, 0
    %27 = vsyncpa [#allocation16], 0
    %s28 = scalar_lea.sflag [#allocation16], 1
    %29 = vsyncpa %s28, 0
    loop: start=0, step=1, limit=6
    $region2: #{tpu_custom_call.1} parent=1 // loop_pre_header
      _
    $region3: #{tpu_custom_call.1} parent=1 // loop_header
      %s31 = sphi 0, %s35
      %p32 = scmp.ge.s32.totalorder %s31, 6
      %s38 = sphi 0, %s50
      %s39 = sphi 0, %s46
      %s40 = sphi 0, %s38
      %s41 = sphi 0, %s39
      %s42 = sphi 0, %s40
      %s43 = sphi 0, %s41
      %s53 = sphi 0, %s55
      %s56 = sphi 0, %s53
      %s57 = sphi 0, %s56
      %s73 = sphi 0, %s57
      %s77 = sphi 0, %s77
      %s79 = sphi 0, %s77
      %s80 = sphi 0, %s79
      %s94 = sphi 0, %s80
      %s98 = sphi 0, %s98
      %s100 = sphi 0, %s98
      %s101 = sphi 0, %s100
      %s115 = sphi 0, %s101
      %s119 = sphi 0, %s119
      %s121 = sphi 0, %s119
      %s122 = sphi 0, %s121
      %s136 = sphi 0, %s122
      %s140 = sphi 0, %s140
      %s142 = sphi 0, %s140
      %s143 = sphi 0, %s142
      %s157 = sphi 0, %s143
      %s161 = sphi 0, %s161
      %s163 = sphi 0, %s161
      %s164 = sphi 0, %s163
      %s178 = sphi 0, %s164
      %s182 = sphi 0, %s182
      %s184 = sphi 0, %s182
      %s185 = sphi 0, %s184
      %s199 = sphi 0, %s185
      %s203 = sphi 0, %s203
      %s205 = sphi 0, %s203
      %s206 = sphi 0, %s205
      %s220 = sphi 0, %s206
      %s224 = sphi 0, %s224
      %s226 = sphi 0, %s224
      %s227 = sphi 0, %s226
      %s241 = sphi 0, %s227
      %s245 = sphi 0, %s245
      %s247 = sphi 0, %s245
      %s248 = sphi 0, %s247
      %s262 = sphi 0, %s248
      %s266 = sphi 0, %s266
      %s268 = sphi 0, %s266
      %s269 = sphi 0, %s268
      %s283 = sphi 0, %s269
      %s287 = sphi 0, %s287
      %s289 = sphi 0, %s287
      %s290 = sphi 0, %s289
      %s304 = sphi 0, %s290
      %s308 = sphi 0, %s308
      %s310 = sphi 0, %s308
      %s311 = sphi 0, %s310
      %s325 = sphi 0, %s311
      %s331 = sphi 0, %s333
      %s334 = sphi 0, %s331
      %s335 = sphi 0, %s334
      %s351 = sphi 0, %s335
      %s359 = sphi 0, %s361
      %s362 = sphi 0, %s359
      %s363 = sphi 0, %s362
      %s379 = sphi 0, %s363
    $region4: #{tpu_custom_call.1} parent=1 // loop_header_branch
      %34 = sbr.rel (%p32) target = $region8
    $region5: #{tpu_custom_call.1} parent=1 // loop_body
      %s36 = ssub.s32 %s31, 1
      %s37 = ssub.s32 %s31, 2
      %s44 = sadd.s32 1, %s39
      %p45 = scmp.ge.s32.totalorder %s44, 2
      %s46 = scalar_select %p45, 0, %s44
      %s47 = sadd.s32 1, %s38
      %s48 = scalar_select %p45, %s47, %s38
      %p49 = scmp.ge.s32.totalorder %s48, 2
      %s50 = scalar_select %p49, 0, %s48
      %s51 = ssub.s32 %s38, %s50
      %p52 = scmp.eq.s32.totalorder %s51, 0
      %s54 = sadd.s32 %s53, 1
      %s55 = scalar_select %p52, %s53, %s54
      %p58 = pneg %p52
      %p59 = scmp.eq.s32.totalorder %s31, 3
      %p60 = por %p58, %p59
      %p61 = scmp.ne.s32.totalorder %s53, %s56
      %p62 = scmp.eq.s32.totalorder %s31, 0
      %p63 = por %p61, %p62
      %p64 = scmp.ne.s32.totalorder %s53, %s56
      %p65 = scmp.eq.s32.totalorder %s36, 3
      %p66 = por %p64, %p65
      %p67 = scmp.ne.s32.totalorder %s56, %s57
      %p68 = scmp.eq.s32.totalorder %s36, 0
      %p69 = por %p67, %p68
      %p70 = scmp.ne.s32.totalorder %s56, %s57
      %p71 = scmp.eq.s32.totalorder %s37, 3
      %p72 = por %p70, %p71
      %p74 = scmp.ne.s32.totalorder %s57, %s73
      %p75 = scmp.eq.s32.totalorder %s37, 0
      %p76 = por %p74, %p75
      %s78 = sadd.s32 %s77, 1
      %p81 = scmp.eq.s32.totalorder %s31, 3
      %p82 = scmp.ne.s32.totalorder %s77, %s79
      %p83 = scmp.eq.s32.totalorder %s31, 0
      %p84 = por %p82, %p83
      %p85 = scmp.ne.s32.totalorder %s77, %s79
      %p86 = scmp.eq.s32.totalorder %s36, 3
      %p87 = por %p85, %p86
      %p88 = scmp.ne.s32.totalorder %s79, %s80
      %p89 = scmp.eq.s32.totalorder %s36, 0
      %p90 = por %p88, %p89
      %p91 = scmp.ne.s32.totalorder %s79, %s80
      %p92 = scmp.eq.s32.totalorder %s37, 3
      %p93 = por %p91, %p92
      %p95 = scmp.ne.s32.totalorder %s80, %s94
      %p96 = scmp.eq.s32.totalorder %s37, 0
      %p97 = por %p95, %p96
      %s99 = sadd.s32 %s98, 1
      %p102 = scmp.eq.s32.totalorder %s31, 3
      %p103 = scmp.ne.s32.totalorder %s98, %s100
      %p104 = scmp.eq.s32.totalorder %s31, 0
      %p105 = por %p103, %p104
      %p106 = scmp.ne.s32.totalorder %s98, %s100
      %p107 = scmp.eq.s32.totalorder %s36, 3
      %p108 = por %p106, %p107
      %p109 = scmp.ne.s32.totalorder %s100, %s101
      %p110 = scmp.eq.s32.totalorder %s36, 0
      %p111 = por %p109, %p110
      %p112 = scmp.ne.s32.totalorder %s100, %s101
      %p113 = scmp.eq.s32.totalorder %s37, 3
      %p114 = por %p112, %p113
      %p116 = scmp.ne.s32.totalorder %s101, %s115
      %p117 = scmp.eq.s32.totalorder %s37, 0
      %p118 = por %p116, %p117
      %s120 = sadd.s32 %s119, 1
      %p123 = scmp.eq.s32.totalorder %s31, 3
      %p124 = scmp.ne.s32.totalorder %s119, %s121
      %p125 = scmp.eq.s32.totalorder %s31, 0
      %p126 = por %p124, %p125
      %p127 = scmp.ne.s32.totalorder %s119, %s121
      %p128 = scmp.eq.s32.totalorder %s36, 3
      %p129 = por %p127, %p128
      %p130 = scmp.ne.s32.totalorder %s121, %s122
      %p131 = scmp.eq.s32.totalorder %s36, 0
      %p132 = por %p130, %p131
      %p133 = scmp.ne.s32.totalorder %s121, %s122
      %p134 = scmp.eq.s32.totalorder %s37, 3
      %p135 = por %p133, %p134
      %p137 = scmp.ne.s32.totalorder %s122, %s136
      %p138 = scmp.eq.s32.totalorder %s37, 0
      %p139 = por %p137, %p138
      %s141 = sadd.s32 %s140, 1
      %p144 = scmp.eq.s32.totalorder %s31, 3
      %p145 = scmp.ne.s32.totalorder %s140, %s142
      %p146 = scmp.eq.s32.totalorder %s31, 0
      %p147 = por %p145, %p146
      %p148 = scmp.ne.s32.totalorder %s140, %s142
      %p149 = scmp.eq.s32.totalorder %s36, 3
      %p150 = por %p148, %p149
      %p151 = scmp.ne.s32.totalorder %s142, %s143
      %p152 = scmp.eq.s32.totalorder %s36, 0
      %p153 = por %p151, %p152
      %p154 = scmp.ne.s32.totalorder %s142, %s143
      %p155 = scmp.eq.s32.totalorder %s37, 3
      %p156 = por %p154, %p155
      %p158 = scmp.ne.s32.totalorder %s143, %s157
      %p159 = scmp.eq.s32.totalorder %s37, 0
      %p160 = por %p158, %p159
      %s162 = sadd.s32 %s161, 1
      %p165 = scmp.eq.s32.totalorder %s31, 3
      %p166 = scmp.ne.s32.totalorder %s161, %s163
      %p167 = scmp.eq.s32.totalorder %s31, 0
      %p168 = por %p166, %p167
      %p169 = scmp.ne.s32.totalorder %s161, %s163
      %p170 = scmp.eq.s32.totalorder %s36, 3
      %p171 = por %p169, %p170
      %p172 = scmp.ne.s32.totalorder %s163, %s164
      %p173 = scmp.eq.s32.totalorder %s36, 0
      %p174 = por %p172, %p173
      %p175 = scmp.ne.s32.totalorder %s163, %s164
      %p176 = scmp.eq.s32.totalorder %s37, 3
      %p177 = por %p175, %p176
      %p179 = scmp.ne.s32.totalorder %s164, %s178
      %p180 = scmp.eq.s32.totalorder %s37, 0
      %p181 = por %p179, %p180
      %s183 = sadd.s32 %s182, 1
      %p186 = scmp.eq.s32.totalorder %s31, 3
      %p187 = scmp.ne.s32.totalorder %s182, %s184
      %p188 = scmp.eq.s32.totalorder %s31, 0
      %p189 = por %p187, %p188
      %p190 = scmp.ne.s32.totalorder %s182, %s184
      %p191 = scmp.eq.s32.totalorder %s36, 3
      %p192 = por %p190, %p191
      %p193 = scmp.ne.s32.totalorder %s184, %s185
      %p194 = scmp.eq.s32.totalorder %s36, 0
      %p195 = por %p193, %p194
      %p196 = scmp.ne.s32.totalorder %s184, %s185
      %p197 = scmp.eq.s32.totalorder %s37, 3
      %p198 = por %p196, %p197
      %p200 = scmp.ne.s32.totalorder %s185, %s199
      %p201 = scmp.eq.s32.totalorder %s37, 0
      %p202 = por %p200, %p201
      %s204 = sadd.s32 %s203, 1
      %p207 = scmp.eq.s32.totalorder %s31, 3
      %p208 = scmp.ne.s32.totalorder %s203, %s205
      %p209 = scmp.eq.s32.totalorder %s31, 0
      %p210 = por %p208, %p209
      %p211 = scmp.ne.s32.totalorder %s203, %s205
      %p212 = scmp.eq.s32.totalorder %s36, 3
      %p213 = por %p211, %p212
      %p214 = scmp.ne.s32.totalorder %s205, %s206
      %p215 = scmp.eq.s32.totalorder %s36, 0
      %p216 = por %p214, %p215
      %p217 = scmp.ne.s32.totalorder %s205, %s206
      %p218 = scmp.eq.s32.totalorder %s37, 3
      %p219 = por %p217, %p218
      %p221 = scmp.ne.s32.totalorder %s206, %s220
      %p222 = scmp.eq.s32.totalorder %s37, 0
      %p223 = por %p221, %p222
      %s225 = sadd.s32 %s224, 1
      %p228 = scmp.eq.s32.totalorder %s31, 3
      %p229 = scmp.ne.s32.totalorder %s224, %s226
      %p230 = scmp.eq.s32.totalorder %s31, 0
      %p231 = por %p229, %p230
      %p232 = scmp.ne.s32.totalorder %s224, %s226
      %p233 = scmp.eq.s32.totalorder %s36, 3
      %p234 = por %p232, %p233
      %p235 = scmp.ne.s32.totalorder %s226, %s227
      %p236 = scmp.eq.s32.totalorder %s36, 0
      %p237 = por %p235, %p236
      %p238 = scmp.ne.s32.totalorder %s226, %s227
      %p239 = scmp.eq.s32.totalorder %s37, 3
      %p240 = por %p238, %p239
      %p242 = scmp.ne.s32.totalorder %s227, %s241
      %p243 = scmp.eq.s32.totalorder %s37, 0
      %p244 = por %p242, %p243
      %s246 = sadd.s32 %s245, 1
      %p249 = scmp.eq.s32.totalorder %s31, 3
      %p250 = scmp.ne.s32.totalorder %s245, %s247
      %p251 = scmp.eq.s32.totalorder %s31, 0
      %p252 = por %p250, %p251
      %p253 = scmp.ne.s32.totalorder %s245, %s247
      %p254 = scmp.eq.s32.totalorder %s36, 3
      %p255 = por %p253, %p254
      %p256 = scmp.ne.s32.totalorder %s247, %s248
      %p257 = scmp.eq.s32.totalorder %s36, 0
      %p258 = por %p256, %p257
      %p259 = scmp.ne.s32.totalorder %s247, %s248
      %p260 = scmp.eq.s32.totalorder %s37, 3
      %p261 = por %p259, %p260
      %p263 = scmp.ne.s32.totalorder %s248, %s262
      %p264 = scmp.eq.s32.totalorder %s37, 0
      %p265 = por %p263, %p264
      %s267 = sadd.s32 %s266, 1
      %p270 = scmp.eq.s32.totalorder %s31, 3
      %p271 = scmp.ne.s32.totalorder %s266, %s268
      %p272 = scmp.eq.s32.totalorder %s31, 0
      %p273 = por %p271, %p272
      %p274 = scmp.ne.s32.totalorder %s266, %s268
      %p275 = scmp.eq.s32.totalorder %s36, 3
      %p276 = por %p274, %p275
      %p277 = scmp.ne.s32.totalorder %s268, %s269
      %p278 = scmp.eq.s32.totalorder %s36, 0
      %p279 = por %p277, %p278
      %p280 = scmp.ne.s32.totalorder %s268, %s269
      %p281 = scmp.eq.s32.totalorder %s37, 3
      %p282 = por %p280, %p281
      %p284 = scmp.ne.s32.totalorder %s269, %s283
      %p285 = scmp.eq.s32.totalorder %s37, 0
      %p286 = por %p284, %p285
      %s288 = sadd.s32 %s287, 1
      %p291 = scmp.eq.s32.totalorder %s31, 3
      %p292 = scmp.ne.s32.totalorder %s287, %s289
      %p293 = scmp.eq.s32.totalorder %s31, 0
      %p294 = por %p292, %p293
      %p295 = scmp.ne.s32.totalorder %s287, %s289
      %p296 = scmp.eq.s32.totalorder %s36, 3
      %p297 = por %p295, %p296
      %p298 = scmp.ne.s32.totalorder %s289, %s290
      %p299 = scmp.eq.s32.totalorder %s36, 0
      %p300 = por %p298, %p299
      %p301 = scmp.ne.s32.totalorder %s289, %s290
      %p302 = scmp.eq.s32.totalorder %s37, 3
      %p303 = por %p301, %p302
      %p305 = scmp.ne.s32.totalorder %s290, %s304
      %p306 = scmp.eq.s32.totalorder %s37, 0
      %p307 = por %p305, %p306
      %s309 = sadd.s32 %s308, 1
      %p312 = scmp.eq.s32.totalorder %s31, 3
      %p313 = scmp.ne.s32.totalorder %s308, %s310
      %p314 = scmp.eq.s32.totalorder %s31, 0
      %p315 = por %p313, %p314
      %p316 = scmp.ne.s32.totalorder %s308, %s310
      %p317 = scmp.eq.s32.totalorder %s36, 3
      %p318 = por %p316, %p317
      %p319 = scmp.ne.s32.totalorder %s310, %s311
      %p320 = scmp.eq.s32.totalorder %s36, 0
      %p321 = por %p319, %p320
      %p322 = scmp.ne.s32.totalorder %s310, %s311
      %p323 = scmp.eq.s32.totalorder %s37, 3
      %p324 = por %p322, %p323
      %p326 = scmp.ne.s32.totalorder %s311, %s325
      %p327 = scmp.eq.s32.totalorder %s37, 0
      %p328 = por %p326, %p327
      %s329 = ssub.s32 %s38, %s50
      %p330 = scmp.eq.s32.totalorder %s329, 0
      %s332 = sadd.s32 %s331, 1
      %s333 = scalar_select %p330, %s331, %s332
      %p336 = pneg %p330
      %p337 = scmp.eq.s32.totalorder %s31, 3
      %p338 = por %p336, %p337
      %p339 = scmp.ne.s32.totalorder %s331, %s334
      %p340 = scmp.eq.s32.totalorder %s31, 0
      %p341 = por %p339, %p340
      %p342 = scmp.ne.s32.totalorder %s331, %s334
      %p343 = scmp.eq.s32.totalorder %s36, 3
      %p344 = por %p342, %p343
      %p345 = scmp.ne.s32.totalorder %s334, %s335
      %p346 = scmp.eq.s32.totalorder %s36, 0
      %p347 = por %p345, %p346
      %p348 = scmp.ne.s32.totalorder %s334, %s335
      %p349 = scmp.eq.s32.totalorder %s37, 3
      %p350 = por %p348, %p349
      %p352 = scmp.ne.s32.totalorder %s335, %s351
      %p353 = scmp.eq.s32.totalorder %s37, 0
      %p354 = por %p352, %p353
      %s355 = ssub.s32 %s39, %s46
      %s356 = ssub.s32 %s38, %s50
      %s357 = sor.u32 %s355, %s356
      %p358 = scmp.eq.s32.totalorder %s357, 0
      %s360 = sadd.s32 %s359, 1
      %s361 = scalar_select %p358, %s359, %s360
      %p364 = pneg %p358
      %p365 = scmp.eq.s32.totalorder %s31, 3
      %p366 = por %p364, %p365
      %p367 = scmp.ne.s32.totalorder %s359, %s362
      %p368 = scmp.eq.s32.totalorder %s31, 0
      %p369 = por %p367, %p368
      %p370 = scmp.ne.s32.totalorder %s359, %s362
      %p371 = scmp.eq.s32.totalorder %s36, 3
      %p372 = por %p370, %p371
      %p373 = scmp.ne.s32.totalorder %s362, %s363
      %p374 = scmp.eq.s32.totalorder %s36, 0
      %p375 = por %p373, %p374
      %p376 = scmp.ne.s32.totalorder %s362, %s363
      %p377 = scmp.eq.s32.totalorder %s37, 3
      %p378 = por %p376, %p377
      %p380 = scmp.ne.s32.totalorder %s363, %s379
      %p381 = scmp.eq.s32.totalorder %s37, 0
      %p382 = por %p380, %p381
      %p383 = scmp.le.s32.totalorder 1, %s31
      %p384 = scmp.lt.s32.totalorder %s31, 5
      %p385 = pnand %p383, %p384
      %p386 = pneg %p385
      // Predicated region
      $region9: #{tpu_custom_call.1} parent=5 // pred_check
        _
      $region10: #{tpu_custom_call.1} parent=5 // pred_check_branch
        %388 = sbr.rel (%p385) target = $region12
      $region11: #{tpu_custom_call.1} parent=5 // pred_region
        %s389 = ssub.s32 %s31, 1
        // Predicated region
        $region13: #{tpu_custom_call.1} parent=11 // pred_check
          %p390 = pneg %p90
        $region14: #{tpu_custom_call.1} parent=11 // pred_check_branch
          %392 = sbr.rel (%p390) target = $region16
        $region15: #{tpu_custom_call.1} parent=11 // pred_region
          %s394 = ssub.s32 16, 16
          %395 = vsyncadd [#allocation4], %s394
          %s397 = sshll.u32 [#allocation3], 4
          %s398 = int_to_ptr.vmem [resolvable:$true] %s397
          %400 = dma.hbm_to_vmem [thread:$0]  %s1, 16, %s398, [#allocation4]
        $region16: #{tpu_custom_call.1} parent=11 // pred_fallthru
          _
        // Predicated region
        $region17: #{tpu_custom_call.1} parent=11 // pred_check
          %p401 = pneg %p111
        $region18: #{tpu_custom_call.1} parent=11 // pred_check_branch
          %403 = sbr.rel (%p401) target = $region20
        $region19: #{tpu_custom_call.1} parent=11 // pred_region
          %s405 = ssub.s32 16, 16
          %406 = vsyncadd [#allocation7], %s405
          %s408 = sshll.u32 [#allocation6], 4
          %s409 = int_to_ptr.vmem [resolvable:$true] %s408
          %411 = dma.hbm_to_vmem [thread:$0]  %s2, 16, %s409, [#allocation7]
        $region20: #{tpu_custom_call.1} parent=11 // pred_fallthru
          _
        // Predicated region
        $region21: #{tpu_custom_call.1} parent=11 // pred_check
          %p412 = pneg %p132
        $region22: #{tpu_custom_call.1} parent=11 // pred_check_branch
          %414 = sbr.rel (%p412) target = $region24
        $region23: #{tpu_custom_call.1} parent=11 // pred_region
          _
        $region24: #{tpu_custom_call.1} parent=11 // pred_fallthru
          _
        // Predicated region
        $region25: #{tpu_custom_call.1} parent=11 // pred_check
          %p415 = pneg %p153
        $region26: #{tpu_custom_call.1} parent=11 // pred_check_branch
          %417 = sbr.rel (%p415) target = $region28
        $region27: #{tpu_custom_call.1} parent=11 // pred_region
          %s419 = ssub.s32 16, 16
          %420 = vsyncadd [#allocation7], %s419
          %s422 = sshll.u32 [#allocation8], 4
          %s423 = int_to_ptr.vmem [resolvable:$true] %s422
          %425 = dma.hbm_to_vmem [thread:$0]  %s4, 16, %s423, [#allocation7]
        $region28: #{tpu_custom_call.1} parent=11 // pred_fallthru
          _
        // Predicated region
        $region29: #{tpu_custom_call.1} parent=11 // pred_check
          %p426 = pneg %p174
        $region30: #{tpu_custom_call.1} parent=11 // pred_check_branch
          %428 = sbr.rel (%p426) target = $region32
        $region31: #{tpu_custom_call.1} parent=11 // pred_region
          _
        $region32: #{tpu_custom_call.1} parent=11 // pred_fallthru
          _
        // Predicated region
        $region33: #{tpu_custom_call.1} parent=11 // pred_check
          %p429 = pneg %p195
        $region34: #{tpu_custom_call.1} parent=11 // pred_check_branch
          %431 = sbr.rel (%p429) target = $region36
        $region35: #{tpu_custom_call.1} parent=11 // pred_region
          %s433 = ssub.s32 16, 16
          %434 = vsyncadd [#allocation10], %s433
          %s436 = sshll.u32 [#allocation9], 4
          %s437 = int_to_ptr.vmem [resolvable:$true] %s436
          %439 = dma.hbm_to_vmem [thread:$0]  %s6, 16, %s437, [#allocation10]
        $region36: #{tpu_custom_call.1} parent=11 // pred_fallthru
          _
        // Predicated region
        $region37: #{tpu_custom_call.1} parent=11 // pred_check
          %p440 = pneg %p216
        $region38: #{tpu_custom_call.1} parent=11 // pred_check_branch
          %442 = sbr.rel (%p440) target = $region40
        $region39: #{tpu_custom_call.1} parent=11 // pred_region
          %s444 = ssub.s32 16, 16
          %445 = vsyncadd [#allocation10], %s444
          %s447 = sshll.u32 [#allocation11], 4
          %s448 = int_to_ptr.vmem [resolvable:$true] %s447
          %450 = dma.hbm_to_vmem [thread:$0]  %s7, 16, %s448, [#allocation10]
        $region40: #{tpu_custom_call.1} parent=11 // pred_fallthru
          _
        // Predicated region
        $region41: #{tpu_custom_call.1} parent=11 // pred_check
          %p451 = pneg %p237
        $region42: #{tpu_custom_call.1} parent=11 // pred_check_branch
          %453 = sbr.rel (%p451) target = $region44
        $region43: #{tpu_custom_call.1} parent=11 // pred_region
          %s455 = ssub.s32 16, 16
          %456 = vsyncadd [#allocation13], %s455
          %s458 = sshll.u32 [#allocation12], 4
          %s459 = int_to_ptr.vmem [resolvable:$true] %s458
          %461 = dma.hbm_to_vmem [thread:$0]  %s8, 16, %s459, [#allocation13]
        $region44: #{tpu_custom_call.1} parent=11 // pred_fallthru
          _
        // Predicated region
        $region45: #{tpu_custom_call.1} parent=11 // pred_check
          %p462 = pneg %p258
        $region46: #{tpu_custom_call.1} parent=11 // pred_check_branch
          %464 = sbr.rel (%p462) target = $region48
        $region47: #{tpu_custom_call.1} parent=11 // pred_region
          _
        $region48: #{tpu_custom_call.1} parent=11 // pred_fallthru
          _
        // Predicated region
        $region49: #{tpu_custom_call.1} parent=11 // pred_check
          %p465 = pneg %p279
        $region50: #{tpu_custom_call.1} parent=11 // pred_check_branch
          %467 = sbr.rel (%p465) target = $region52
        $region51: #{tpu_custom_call.1} parent=11 // pred_region
          _
        $region52: #{tpu_custom_call.1} parent=11 // pred_fallthru
          _
        // Predicated region
        $region53: #{tpu_custom_call.1} parent=11 // pred_check
          %p468 = pneg %p300
        $region54: #{tpu_custom_call.1} parent=11 // pred_check_branch
          %470 = sbr.rel (%p468) target = $region56
        $region55: #{tpu_custom_call.1} parent=11 // pred_region
          _
        $region56: #{tpu_custom_call.1} parent=11 // pred_fallthru
          _
        // Predicated region
        $region57: #{tpu_custom_call.1} parent=11 // pred_check
          %p471 = pneg %p321
        $region58: #{tpu_custom_call.1} parent=11 // pred_check_branch
          %473 = sbr.rel (%p471) target = $region60
        $region59: #{tpu_custom_call.1} parent=11 // pred_region
          _
        $region60: #{tpu_custom_call.1} parent=11 // pred_fallthru
          _
      $region12: #{tpu_custom_call.1} parent=5 // pred_fallthru
        _
      %p474 = scmp.lt.s32.totalorder %s31, 4
      // Predicated region
      $region61: #{tpu_custom_call.1} parent=5 // pred_check
        %p475 = pneg %p474
      $region62: #{tpu_custom_call.1} parent=5 // pred_check_branch
        %477 = sbr.rel (%p475) target = $region64
      $region63: #{tpu_custom_call.1} parent=5 // pred_region
        // Predicated region
        $region65: #{tpu_custom_call.1} parent=63 // pred_check
          %p478 = pneg %p63
        $region66: #{tpu_custom_call.1} parent=63 // pred_check_branch
          %480 = sbr.rel (%p478) target = $region68
        $region67: #{tpu_custom_call.1} parent=63 // pred_region
          %p481 = scmp.lt.s32.totalorder %s38, 1
          %s482 = scalar_select %p481, %s38, 1
          %s483 = smul.addr %s482, 8
          %s484 = scalar_lea.vmem %s0, %s483
        $region68: #{tpu_custom_call.1} parent=63 // pred_fallthru
          _
      $region64: #{tpu_custom_call.1} parent=5 // pred_fallthru
        _
      %p485 = scmp.le.s32.totalorder 1, %s31
      %p486 = scmp.lt.s32.totalorder %s31, 5
      %p487 = pnand %p485, %p486
      %p488 = pneg %p487
      // Predicated region
      $region69: #{tpu_custom_call.1} parent=5 // pred_check
        _
      $region70: #{tpu_custom_call.1} parent=5 // pred_check_branch
        %490 = sbr.rel (%p487) target = $region72
      $region71: #{tpu_custom_call.1} parent=5 // pred_region
        %s491 = ssub.s32 %s31, 1
        // Predicated region
        $region73: #{tpu_custom_call.1} parent=71 // pred_check
          %p492 = pneg %p90
        $region74: #{tpu_custom_call.1} parent=71 // pred_check_branch
          %494 = sbr.rel (%p492) target = $region76
        $region75: #{tpu_custom_call.1} parent=71 // pred_region
          %495 = dma.done [#allocation4], 16
        $region76: #{tpu_custom_call.1} parent=71 // pred_fallthru
          _
        // Predicated region
        $region77: #{tpu_custom_call.1} parent=71 // pred_check
          %p496 = pneg %p111
        $region78: #{tpu_custom_call.1} parent=71 // pred_check_branch
          %498 = sbr.rel (%p496) target = $region80
        $region79: #{tpu_custom_call.1} parent=71 // pred_region
          %499 = dma.done [#allocation7], 16
        $region80: #{tpu_custom_call.1} parent=71 // pred_fallthru
          _
        // Predicated region
        $region81: #{tpu_custom_call.1} parent=71 // pred_check
          %p500 = pneg %p153
        $region82: #{tpu_custom_call.1} parent=71 // pred_check_branch
          %502 = sbr.rel (%p500) target = $region84
        $region83: #{tpu_custom_call.1} parent=71 // pred_region
          %503 = dma.done [#allocation7], 16
        $region84: #{tpu_custom_call.1} parent=71 // pred_fallthru
          _
        // Predicated region
        $region85: #{tpu_custom_call.1} parent=71 // pred_check
          %p504 = pneg %p195
        $region86: #{tpu_custom_call.1} parent=71 // pred_check_branch
          %506 = sbr.rel (%p504) target = $region88
        $region87: #{tpu_custom_call.1} parent=71 // pred_region
          %507 = dma.done [#allocation10], 16
        $region88: #{tpu_custom_call.1} parent=71 // pred_fallthru
          _
        // Predicated region
        $region89: #{tpu_custom_call.1} parent=71 // pred_check
          %p508 = pneg %p216
        $region90: #{tpu_custom_call.1} parent=71 // pred_check_branch
          %510 = sbr.rel (%p508) target = $region92
        $region91: #{tpu_custom_call.1} parent=71 // pred_region
          %511 = dma.done [#allocation10], 16
        $region92: #{tpu_custom_call.1} parent=71 // pred_fallthru
          _
        // Predicated region
        $region93: #{tpu_custom_call.1} parent=71 // pred_check
          %p512 = pneg %p237
        $region94: #{tpu_custom_call.1} parent=71 // pred_check_branch
          %514 = sbr.rel (%p512) target = $region96
        $region95: #{tpu_custom_call.1} parent=71 // pred_region
          %515 = dma.done [#allocation13], 16
        $region96: #{tpu_custom_call.1} parent=71 // pred_fallthru
          _
        %p516 = scmp.lt.s32.totalorder %s40, 1
        %s517 = scalar_select %p516, %s40, 1
        %s518 = smul.addr %s517, 8
        %s519 = scalar_lea.vmem %s0, %s518
        %p520 = pneg %p69
        %p521 = pneg %p66
        %p522 = pneg %p90
        %p523 = pneg %p87
        %p524 = pneg %p111
        %p525 = pneg %p108
        %p526 = pneg %p132
        %p527 = pneg %p129
        %p528 = pneg %p153
        %p529 = pneg %p150
        %p530 = pneg %p174
        %p531 = pneg %p171
        %p532 = pneg %p195
        %p533 = pneg %p192
        %p534 = pneg %p216
        %p535 = pneg %p213
        %p536 = pneg %p237
        %p537 = pneg %p234
        %p538 = pneg %p258
        %p539 = pneg %p255
        %p540 = pneg %p279
        %p541 = pneg %p276
        %p542 = pneg %p300
        %p543 = pneg %p297
        %p544 = pneg %p321
        %p545 = pneg %p318
        %p546 = pneg %p347
        %p547 = pneg %p344
        %s548 = sand.u32 %s334, 1
        %s549 = scalar_lea.sflag [#allocation5], %s548
        %s550 = sand.u32 %s334, 1
        %s551 = smul.addr %s550, 8
        %s552 = scalar_lea.vmem [#allocation14], %s551
        %p553 = pneg %p375
        %p554 = pneg %p372
        %s555 = sand.u32 %s362, 1
        %s556 = scalar_lea.sflag [#allocation16], %s555
        %s557 = sand.u32 %s362, 1
        %s558 = smul.addr %s557, 4
        %s559 = scalar_lea.vmem [#allocation15], %s558
        %p560 = scmp.lt.s32.totalorder %s40, 1
        %s561 = scalar_select %p560, %s40, 1
        %s562 = smul.addr %s561, 8
        %s563 = scalar_lea.vmem %s0, %s562
        %p565 = scmp.eq.s32.totalorder %s41, 0
        // Predicated region
        $region97: #{tpu_custom_call.1} parent=71 // pred_check
          %p566 = pneg %p565
        $region98: #{tpu_custom_call.1} parent=71 // pred_check_branch
          %568 = sbr.rel (%p566) target = $region100
        $region99: #{tpu_custom_call.1} parent=71 // pred_region
          %v569 = vld [vmem:[%s563] sm:$0xff]
          %vm570 = vcmask 261120
          %571 = vst.msk [vmem:[#allocation2] sm:$0xff] %vm570, %v569
        $region100: #{tpu_custom_call.1} parent=71 // pred_fallthru
          _
        %v572 = vld [vmem:[#allocation2] sm:$0xff]
        %vm573 = vcmask 261120
        %v574 = vsel %vm573, %v572, 0.0
        %575 = vadd.xlane.f32.xlu0 %v574
        %v576 = vpop.xlane.xlu0 %575
        %v577 = vrcp.pop 32.0
        %v578 = vmul.f32 %v576, %v577
        %v579 = vsub.f32 %v572, %v578
        %v580 = vmul.f32 %v579, %v579
        %v581 = vsel %vm573, %v580, 0.0
        %582 = vadd.xlane.f32.xlu0 %v581
        %v583 = vpop.xlane.xlu0 %582
        %v584 = vmul.f32 %v583, %v577
        %v585 = vadd.f32 %v584, 1e-05
        %v586 = vrsqrt.pop %v585
        %v587 = vmul.f32 %v579, %v586
        %v588 = vld [vmem:[#allocation3] sm:$0x1]
        %v590 = vlaneseq
        %v591 = vshrl.u32 %v590, 7
        %v592 = vsub.s32 0, %v591
        %v593 = vrot.slane %v588, %v592
        %v595 = vmul.f32 %v587, %v593
        %v596 = vld [vmem:[#allocation6] sm:$0x1]
        %v598 = vlaneseq
        %v599 = vshrl.u32 %v598, 7
        %v600 = vsub.s32 0, %v599
        %v601 = vrot.slane %v596, %v600
        %v603 = vadd.f32 %v595, %v601
        %v604 = vpack.c.bf16 %v603, %v603
        %v605 = vld [vmem:[%s3] sm:$0xf]
        %v606 = vld [vmem:[%s3 + $0x4] sm:$0xf]
        %v607 = vld [vmem:[%s3 + $0x8] sm:$0xf]
        %v608 = vld [vmem:[%s3 + $0xc] sm:$0xf]
        %v609 = vld [vmem:[#allocation8] sm:$0x1]
        %v611 = vlaneseq
        %v612 = vshrl.u32 %v611, 7
        %v613 = vsub.s32 0, %v612
        %v614 = vrot.slane %v609, %v613
        %v620 = vunpack.c.l.b16 %v605
        %v621 = vunpack.c.l.b16 %v606
        %v622 = vunpack.c.l.b16 %v607
        %v623 = vunpack.c.l.b16 %v608
        %v624 = vpack.c.b16 %v621, %v620
        %v625 = vpack.c.b16 %v623, %v622
        %v629 = vsel %vm573, %v604, 0
        %631 = vmatprep.subr.bf16.mxu0 0
        %632 = vmatpush1.bf16.msra.mxu0 0
        %633 = vmatprep.subr.bf16.mxu0 0
        %634 = vmatpush1.bf16.msra.mxu0 0
        %635 = vmatprep.subr.bf16.mxu0 0
        %636 = vmatpush1.bf16.msra.mxu0 0
        %637 = vmatprep.subr.bf16.mxu0 0
        %638 = vmatpush1.bf16.msra.mxu0 0
        %639 = vmatprep.subr.bf16.mxu0 0
        %640 = vmatpush1.bf16.msra.mxu0 0
        %641 = vmatprep.subr.bf16.mxu0 0
        %642 = vmatpush1.bf16.msra.mxu0 0
        %643 = vmatprep.subr.bf16.mxu0 0
        %644 = vmatpush1.bf16.msra.mxu0 %v625
        %645 = vmatprep.subr.bf16.mxu0 0
        %646 = vmatpush1.bf16.msra.mxu0 %v624
        %647 = vmatprep.subr.bf16.mxu0 0
        %648 = vmatpush2.bf16.msra.mxu0 0
        %649 = vmatprep.subr.bf16.mxu0 0
        %650 = vmatpush2.bf16.msra.mxu0 0
        %651 = vmatprep.subr.bf16.mxu0 0
        %652 = vmatpush2.bf16.msra.mxu0 0
        %653 = vmatprep.subr.bf16.mxu0 0
        %654 = vmatpush2.bf16.msra.mxu0 0
        %655 = vmatprep.subr.bf16.mxu0 0
        %656 = vmatpush2.bf16.msra.mxu0 0
        %657 = vmatprep.subr.bf16.mxu0 0
        %658 = vmatpush2.bf16.msra.mxu0 0
        %659 = vmatprep.subr.bf16.mxu0 0
        %660 = vmatpush2.bf16.msra.mxu0 0
        %661 = vmatprep.subr.bf16.mxu0 0
        %662 = vmatpush2.bf16.msra.mxu0 0
        %663 = vmatprep.mubr.bf16.mxu0 0
        %664 = vmatmul.mubr.bf16.gmra.mxu0 %v629
        %v665 = vpop.f32.mrf.mxu0
        %v666 = vadd.f32 %v614, %v665
        %v667 = vpop.f32.mrf.mxu0
        %v668 = vpop.f32.mrf.mxu0
        %v669 = vpop.f32.mrf.mxu0
        %670 = vdwg.mxu0
        %672 = vrot.lane.b32.xlu0 %v666, 120
        %v673 = vpop.permute.xlu0 %672
        %675 = vrot.lane.b32.xlu0 %v666, 112
        %v676 = vpop.permute.xlu0 %675
        %678 = vrot.lane.b32.xlu0 %v666, 104
        %v679 = vpop.permute.xlu0 %678
        %v681 = vpack.c.bf16 %v666, %v666
        %v682 = vpack.c.bf16 %v673, %v673
        %v683 = vpack.c.bf16 %v676, %v676
        %v684 = vpack.c.bf16 %v679, %v679
        %686 = vrot.lane.b32.xlu0 %v681, 96
        %v687 = vpop.permute.xlu0 %686
        %vm688 = vcmask 64512
        %v690 = vsel %vm688, %v681, 0
        %v693 = vsel %vm688, %v687, 0
        %695 = vmatprep.subr.bf16.mxu0 0
        %696 = vmatpush1.bf16.xpose.msra.mxu0 0
        %697 = vmatprep.subr.bf16.mxu0 0
        %698 = vmatpush1.bf16.xpose.msra.mxu0 0
        %699 = vmatprep.subr.bf16.mxu0 0
        %700 = vmatpush1.bf16.xpose.msra.mxu0 0
        %701 = vmatprep.subr.bf16.mxu0 0
        %702 = vmatpush1.bf16.xpose.msra.mxu0 0
        %703 = vmatprep.subr.bf16.mxu0 0
        %704 = vmatpush1.bf16.xpose.msra.mxu0 0
        %705 = vmatprep.subr.bf16.mxu0 0
        %706 = vmatpush1.bf16.xpose.msra.mxu0 0
        %707 = vmatprep.subr.bf16.mxu0 0
        %708 = vmatpush1.bf16.xpose.msra.mxu0 0
        %709 = vmatprep.subr.bf16.mxu0 0
        %710 = vmatpush1.bf16.xpose.msra.mxu0 %v693
        %711 = vmatprep.subr.bf16.mxu0 0
        %712 = vmatpush2.bf16.xpose.msra.mxu0 0
        %713 = vmatprep.subr.bf16.mxu0 0
        %714 = vmatpush2.bf16.xpose.msra.mxu0 0
        %715 = vmatprep.subr.bf16.mxu0 0
        %716 = vmatpush2.bf16.xpose.msra.mxu0 0
        %717 = vmatprep.subr.bf16.mxu0 0
        %718 = vmatpush2.bf16.xpose.msra.mxu0 0
        %719 = vmatprep.subr.bf16.mxu0 0
        %720 = vmatpush2.bf16.xpose.msra.mxu0 0
        %721 = vmatprep.subr.bf16.mxu0 0
        %722 = vmatpush2.bf16.xpose.msra.mxu0 0
        %723 = vmatprep.subr.bf16.mxu0 0
        %724 = vmatpush2.bf16.xpose.msra.mxu0 0
        %725 = vmatprep.subr.bf16.mxu0 0
        %726 = vmatpush2.bf16.xpose.msra.mxu0 0
        %727 = vmatprep.mubr.bf16.mxu0 0
        %728 = vmatmul.mubr.bf16.gmra.mxu0 %v690
        %v729 = vpop.f32.mrf.mxu0
        %v730 = vadd.f32 0.0, %v729
        %v731 = vpop.f32.mrf.mxu0
        %v732 = vpop.f32.mrf.mxu0
        %v733 = vpop.f32.mrf.mxu0
        %734 = vdwg.mxu0
        %736 = vrot.lane.b32.xlu0 %v682, 96
        %v737 = vpop.permute.xlu0 %736
        %v739 = vsel %vm688, %v682, 0
        %v742 = vsel %vm688, %v737, 0
        %744 = vmatprep.subr.bf16.mxu0 0
        %745 = vmatpush1.bf16.xpose.msra.mxu0 0
        %746 = vmatprep.subr.bf16.mxu0 0
        %747 = vmatpush1.bf16.xpose.msra.mxu0 0
        %748 = vmatprep.subr.bf16.mxu0 0
        %749 = vmatpush1.bf16.xpose.msra.mxu0 0
        %750 = vmatprep.subr.bf16.mxu0 0
        %751 = vmatpush1.bf16.xpose.msra.mxu0 0
        %752 = vmatprep.subr.bf16.mxu0 0
        %753 = vmatpush1.bf16.xpose.msra.mxu0 0
        %754 = vmatprep.subr.bf16.mxu0 0
        %755 = vmatpush1.bf16.xpose.msra.mxu0 0
        %756 = vmatprep.subr.bf16.mxu0 0
        %757 = vmatpush1.bf16.xpose.msra.mxu0 0
        %758 = vmatprep.subr.bf16.mxu0 0
        %759 = vmatpush1.bf16.xpose.msra.mxu0 %v742
        %760 = vmatprep.subr.bf16.mxu0 0
        %761 = vmatpush2.bf16.xpose.msra.mxu0 0
        %762 = vmatprep.subr.bf16.mxu0 0
        %763 = vmatpush2.bf16.xpose.msra.mxu0 0
        %764 = vmatprep.subr.bf16.mxu0 0
        %765 = vmatpush2.bf16.xpose.msra.mxu0 0
        %766 = vmatprep.subr.bf16.mxu0 0
        %767 = vmatpush2.bf16.xpose.msra.mxu0 0
        %768 = vmatprep.subr.bf16.mxu0 0
        %769 = vmatpush2.bf16.xpose.msra.mxu0 0
        %770 = vmatprep.subr.bf16.mxu0 0
        %771 = vmatpush2.bf16.xpose.msra.mxu0 0
        %772 = vmatprep.subr.bf16.mxu0 0
        %773 = vmatpush2.bf16.xpose.msra.mxu0 0
        %774 = vmatprep.subr.bf16.mxu0 0
        %775 = vmatpush2.bf16.xpose.msra.mxu0 0
        %776 = vmatprep.mubr.bf16.mxu0 0
        %777 = vmatmul.mubr.bf16.gmra.mxu0 %v739
        %v778 = vpop.f32.mrf.mxu0
        %v779 = vadd.f32 0.0, %v778
        %v780 = vpop.f32.mrf.mxu0
        %v781 = vpop.f32.mrf.mxu0
        %v782 = vpop.f32.mrf.mxu0
        %783 = vdwg.mxu0
        %785 = vrot.lane.b32.xlu0 %v683, 96
        %v786 = vpop.permute.xlu0 %785
        %v788 = vsel %vm688, %v683, 0
        %v791 = vsel %vm688, %v786, 0
        %793 = vmatprep.subr.bf16.mxu0 0
        %794 = vmatpush1.bf16.xpose.msra.mxu0 0
        %795 = vmatprep.subr.bf16.mxu0 0
        %796 = vmatpush1.bf16.xpose.msra.mxu0 0
        %797 = vmatprep.subr.bf16.mxu0 0
        %798 = vmatpush1.bf16.xpose.msra.mxu0 0
        %799 = vmatprep.subr.bf16.mxu0 0
        %800 = vmatpush1.bf16.xpose.msra.mxu0 0
        %801 = vmatprep.subr.bf16.mxu0 0
        %802 = vmatpush1.bf16.xpose.msra.mxu0 0
        %803 = vmatprep.subr.bf16.mxu0 0
        %804 = vmatpush1.bf16.xpose.msra.mxu0 0
        %805 = vmatprep.subr.bf16.mxu0 0
        %806 = vmatpush1.bf16.xpose.msra.mxu0 0
        %807 = vmatprep.subr.bf16.mxu0 0
        %808 = vmatpush1.bf16.xpose.msra.mxu0 %v791
        %809 = vmatprep.subr.bf16.mxu0 0
        %810 = vmatpush2.bf16.xpose.msra.mxu0 0
        %811 = vmatprep.subr.bf16.mxu0 0
        %812 = vmatpush2.bf16.xpose.msra.mxu0 0
        %813 = vmatprep.subr.bf16.mxu0 0
        %814 = vmatpush2.bf16.xpose.msra.mxu0 0
        %815 = vmatprep.subr.bf16.mxu0 0
        %816 = vmatpush2.bf16.xpose.msra.mxu0 0
        %817 = vmatprep.subr.bf16.mxu0 0
        %818 = vmatpush2.bf16.xpose.msra.mxu0 0
        %819 = vmatprep.subr.bf16.mxu0 0
        %820 = vmatpush2.bf16.xpose.msra.mxu0 0
        %821 = vmatprep.subr.bf16.mxu0 0
        %822 = vmatpush2.bf16.xpose.msra.mxu0 0
        %823 = vmatprep.subr.bf16.mxu0 0
        %824 = vmatpush2.bf16.xpose.msra.mxu0 0
        %825 = vmatprep.mubr.bf16.mxu0 0
        %826 = vmatmul.mubr.bf16.gmra.mxu0 %v788
        %v827 = vpop.f32.mrf.mxu0
        %v828 = vadd.f32 0.0, %v827
        %v829 = vpop.f32.mrf.mxu0
        %v830 = vpop.f32.mrf.mxu0
        %v831 = vpop.f32.mrf.mxu0
        %832 = vdwg.mxu0
        %834 = vrot.lane.b32.xlu0 %v684, 96
        %v835 = vpop.permute.xlu0 %834
        %v837 = vsel %vm688, %v684, 0
        %v840 = vsel %vm688, %v835, 0
        %842 = vmatprep.subr.bf16.mxu0 0
        %843 = vmatpush1.bf16.xpose.msra.mxu0 0
        %844 = vmatprep.subr.bf16.mxu0 0
        %845 = vmatpush1.bf16.xpose.msra.mxu0 0
        %846 = vmatprep.subr.bf16.mxu0 0
        %847 = vmatpush1.bf16.xpose.msra.mxu0 0
        %848 = vmatprep.subr.bf16.mxu0 0
        %849 = vmatpush1.bf16.xpose.msra.mxu0 0
        %850 = vmatprep.subr.bf16.mxu0 0
        %851 = vmatpush1.bf16.xpose.msra.mxu0 0
        %852 = vmatprep.subr.bf16.mxu0 0
        %853 = vmatpush1.bf16.xpose.msra.mxu0 0
        %854 = vmatprep.subr.bf16.mxu0 0
        %855 = vmatpush1.bf16.xpose.msra.mxu0 0
        %856 = vmatprep.subr.bf16.mxu0 0
        %857 = vmatpush1.bf16.xpose.msra.mxu0 %v840
        %858 = vmatprep.subr.bf16.mxu0 0
        %859 = vmatpush2.bf16.xpose.msra.mxu0 0
        %860 = vmatprep.subr.bf16.mxu0 0
        %861 = vmatpush2.bf16.xpose.msra.mxu0 0
        %862 = vmatprep.subr.bf16.mxu0 0
        %863 = vmatpush2.bf16.xpose.msra.mxu0 0
        %864 = vmatprep.subr.bf16.mxu0 0
        %865 = vmatpush2.bf16.xpose.msra.mxu0 0
        %866 = vmatprep.subr.bf16.mxu0 0
        %867 = vmatpush2.bf16.xpose.msra.mxu0 0
        %868 = vmatprep.subr.bf16.mxu0 0
        %869 = vmatpush2.bf16.xpose.msra.mxu0 0
        %870 = vmatprep.subr.bf16.mxu0 0
        %871 = vmatpush2.bf16.xpose.msra.mxu0 0
        %872 = vmatprep.subr.bf16.mxu0 0
        %873 = vmatpush2.bf16.xpose.msra.mxu0 0
        %874 = vmatprep.mubr.bf16.mxu0 0
        %875 = vmatmul.mubr.bf16.gmra.mxu0 %v837
        %v876 = vpop.f32.mrf.mxu0
        %v877 = vadd.f32 0.0, %v876
        %v878 = vpop.f32.mrf.mxu0
        %v879 = vpop.f32.mrf.mxu0
        %v880 = vpop.f32.mrf.mxu0
        %881 = vdwg.mxu0
        %v882 = vsel %vm688, %v730, -inf
        %883 = vmax.xlane.f32.xlu0 %v882
        %v884 = vpop.xlane.xlu0 %883
        %v885 = vsel %vm688, %v779, -inf
        %886 = vmax.xlane.f32.xlu0 %v885
        %v887 = vpop.xlane.xlu0 %886
        %v888 = vsel %vm688, %v828, -inf
        %889 = vmax.xlane.f32.xlu0 %v888
        %v890 = vpop.xlane.xlu0 %889
        %v891 = vsel %vm688, %v877, -inf
        %892 = vmax.xlane.f32.xlu0 %v891
        %v893 = vpop.xlane.xlu0 %892
        %v894 = vsub.f32 %v730, %v884
        %v895 = vsub.f32 %v779, %v887
        %v896 = vsub.f32 %v828, %v890
        %v897 = vsub.f32 %v877, %v893
        %v898 = vmul.f32 %v894, 1.442695
        %v899 = vpow.pop %v898
        %v900 = vmul.f32 %v895, 1.442695
        %v901 = vpow.pop %v900
        %v902 = vmul.f32 %v896, 1.442695
        %v903 = vpow.pop %v902
        %v904 = vmul.f32 %v897, 1.442695
        %v905 = vpow.pop %v904
        %v906 = vsel %vm688, %v899, 0.0
        %907 = vadd.xlane.f32.xlu0 %v906
        %v908 = vpop.xlane.xlu0 %907
        %v909 = vsel %vm688, %v901, 0.0
        %910 = vadd.xlane.f32.xlu0 %v909
        %v911 = vpop.xlane.xlu0 %910
        %v912 = vsel %vm688, %v903, 0.0
        %913 = vadd.xlane.f32.xlu0 %v912
        %v914 = vpop.xlane.xlu0 %913
        %v915 = vsel %vm688, %v905, 0.0
        %916 = vadd.xlane.f32.xlu0 %v915
        %v917 = vpop.xlane.xlu0 %916
        %v918 = vrcp.pop %v908
        %v919 = vrcp.pop %v911
        %v920 = vrcp.pop %v914
        %v921 = vrcp.pop %v917
        %v922 = vmul.f32 %v899, %v918
        %v923 = vmul.f32 %v901, %v919
        %v924 = vmul.f32 %v903, %v920
        %v925 = vmul.f32 %v905, %v921
        %v926 = vcombine.low %v922, %v924
        %v927 = vcombine.high %v922, %v924
        %v929 = vunpack.c.l.s4 1983009808
        %v930 = vunpack.c.0.s8 %v929
        %v931 = vlaneseq
        %v932 = vshrl.u32 %v931, 7
        %v933 = vsub.s32 %v930, %v932
        %v934 = vrot.slane %v926, %v933
        %v936 = vunpack.c.l.s4 1983009808
        %v937 = vunpack.c.0.s8 %v936
        %v938 = vlaneseq
        %v939 = vshrl.u32 %v938, 7
        %v940 = vsub.s32 %v937, %v939
        %v941 = vrot.slane %v927, %v940
        %v942 = vcombine.low %v923, %v925
        %v943 = vcombine.high %v923, %v925
        %v945 = vunpack.c.l.s4 1983009808
        %v946 = vunpack.c.0.s8 %v945
        %v947 = vlaneseq
        %v948 = vshrl.u32 %v947, 7
        %v949 = vsub.s32 %v946, %v948
        %v950 = vrot.slane %v942, %v949
        %v952 = vunpack.c.l.s4 1983009808
        %v953 = vunpack.c.0.s8 %v952
        %v954 = vlaneseq
        %v955 = vshrl.u32 %v954, 7
        %v956 = vsub.s32 %v953, %v955
        %v957 = vrot.slane %v943, %v956
        %v958 = vcombine.low %v934, %v950
        %v959 = vcombine.high %v934, %v950
        %v961 = vunpack.c.l.s4 1934713408
        %v962 = vunpack.c.0.s8 %v961
        %v963 = vlaneseq
        %v964 = vshrl.u32 %v963, 7
        %v965 = vsub.s32 %v962, %v964
        %v966 = vrot.slane %v958, %v965
        %v968 = vunpack.c.l.s4 1934713408
        %v969 = vunpack.c.0.s8 %v968
        %v970 = vlaneseq
        %v971 = vshrl.u32 %v970, 7
        %v972 = vsub.s32 %v969, %v971
        %v973 = vrot.slane %v959, %v972
        %v974 = vcombine.low %v941, %v957
        %v975 = vcombine.high %v941, %v957
        %v977 = vunpack.c.l.s4 1934713408
        %v978 = vunpack.c.0.s8 %v977
        %v979 = vlaneseq
        %v980 = vshrl.u32 %v979, 7
        %v981 = vsub.s32 %v978, %v980
        %v982 = vrot.slane %v974, %v981
        %v984 = vunpack.c.l.s4 1934713408
        %v985 = vunpack.c.0.s8 %v984
        %v986 = vlaneseq
        %v987 = vshrl.u32 %v986, 7
        %v988 = vsub.s32 %v985, %v987
        %v989 = vrot.slane %v975, %v988
        %v990 = vcombine.high %v966, 0.0
        %v991 = vcombine.high %v973, 0.0
        %v992 = vcombine.high %v982, 0.0
        %v993 = vcombine.high %v989, 0.0
        %995 = vrot.lane.b32.xlu0 %v990, 8
        %v996 = vpop.permute.xlu0 %995
        %999 = vrot.lane.b32.xlu0 %v973, 16
        %v1000 = vpop.permute.xlu0 %999
        %1003 = vrot.lane.b32.xlu0 %v991, 24
        %v1004 = vpop.permute.xlu0 %1003
        %1007 = vrot.lane.b32.xlu0 %v982, 32
        %v1008 = vpop.permute.xlu0 %1007
        %1011 = vrot.lane.b32.xlu0 %v992, 40
        %v1012 = vpop.permute.xlu0 %1011
        %1015 = vrot.lane.b32.xlu0 %v989, 48
        %v1016 = vpop.permute.xlu0 %1015
        %1019 = vrot.lane.b32.xlu0 %v993, 56
        %v1020 = vpop.permute.xlu0 %1019
        %v1022 = vsel %vm688, %v966, %v996
        %vm1023 = vcmask 130048
        %v1024 = vsel %vm1023, %v1022, %v1000
        %vm1025 = vcmask 195584
        %v1026 = vsel %vm1025, %v1024, %v1004
        %v1027 = vsel %vm573, %v1026, %v1008
        %vm1028 = vcmask 326656
        %v1029 = vsel %vm1028, %v1027, %v1012
        %vm1030 = vcmask 392192
        %v1031 = vsel %vm1030, %v1029, %v1016
        %vm1032 = vcmask 457728
        %v1033 = vsel %vm1032, %v1031, %v1020
        %vm1034 = vcmask 519168
        %1035 = vst.msk [vmem:[%s559] sm:$0xf] %vm1034, %v1033
        %v1036 = vpack.c.bf16 %v922, %v922
        %v1037 = vpack.c.bf16 %v923, %v923
        %v1038 = vpack.c.bf16 %v924, %v924
        %v1039 = vpack.c.bf16 %v925, %v925
        %1040 = vrot.lane.b32.xlu0 %v681, 64
        %v1041 = vpop.permute.xlu0 %1040
        %v1043 = vsel %vm688, %v1036, 0
        %vm1045 = vcmask 1043456
        %v1047 = vsel %vm1045, %v1041, 0
        %1049 = vmatprep.subr.bf16.mxu0 0
        %1050 = vmatpush1.bf16.msra.mxu0 0
        %1051 = vmatprep.subr.bf16.mxu0 0
        %1052 = vmatpush1.bf16.msra.mxu0 0
        %1053 = vmatprep.subr.bf16.mxu0 0
        %1054 = vmatpush1.bf16.msra.mxu0 0
        %1055 = vmatprep.subr.bf16.mxu0 0
        %1056 = vmatpush1.bf16.msra.mxu0 0
        %1057 = vmatprep.subr.bf16.mxu0 0
        %1058 = vmatpush1.bf16.msra.mxu0 0
        %1059 = vmatprep.subr.bf16.mxu0 0
        %1060 = vmatpush1.bf16.msra.mxu0 0
        %1061 = vmatprep.subr.bf16.mxu0 0
        %1062 = vmatpush1.bf16.msra.mxu0 0
        %1063 = vmatprep.subr.bf16.mxu0 0
        %1064 = vmatpush1.bf16.msra.mxu0 %v1047
        %1065 = vmatprep.subr.bf16.mxu0 0
        %1066 = vmatpush2.bf16.msra.mxu0 0
        %1067 = vmatprep.subr.bf16.mxu0 0
        %1068 = vmatpush2.bf16.msra.mxu0 0
        %1069 = vmatprep.subr.bf16.mxu0 0
        %1070 = vmatpush2.bf16.msra.mxu0 0
        %1071 = vmatprep.subr.bf16.mxu0 0
        %1072 = vmatpush2.bf16.msra.mxu0 0
        %1073 = vmatprep.subr.bf16.mxu0 0
        %1074 = vmatpush2.bf16.msra.mxu0 0
        %1075 = vmatprep.subr.bf16.mxu0 0
        %1076 = vmatpush2.bf16.msra.mxu0 0
        %1077 = vmatprep.subr.bf16.mxu0 0
        %1078 = vmatpush2.bf16.msra.mxu0 0
        %1079 = vmatprep.subr.bf16.mxu0 0
        %1080 = vmatpush2.bf16.msra.mxu0 0
        %1081 = vmatprep.mubr.bf16.mxu0 0
        %1082 = vmatmul.mubr.bf16.gmra.mxu0 %v1043
        %v1083 = vpop.f32.mrf.mxu0
        %v1084 = vadd.f32 0.0, %v1083
        %v1085 = vpop.f32.mrf.mxu0
        %v1086 = vpop.f32.mrf.mxu0
        %v1087 = vpop.f32.mrf.mxu0
        %1088 = vdwg.mxu0
        %1089 = vrot.lane.b32.xlu0 %v682, 64
        %v1090 = vpop.permute.xlu0 %1089
        %v1092 = vsel %vm688, %v1037, 0
        %v1095 = vsel %vm1045, %v1090, 0
        %1097 = vmatprep.subr.bf16.mxu0 0
        %1098 = vmatpush1.bf16.msra.mxu0 0
        %1099 = vmatprep.subr.bf16.mxu0 0
        %1100 = vmatpush1.bf16.msra.mxu0 0
        %1101 = vmatprep.subr.bf16.mxu0 0
        %1102 = vmatpush1.bf16.msra.mxu0 0
        %1103 = vmatprep.subr.bf16.mxu0 0
        %1104 = vmatpush1.bf16.msra.mxu0 0
        %1105 = vmatprep.subr.bf16.mxu0 0
        %1106 = vmatpush1.bf16.msra.mxu0 0
        %1107 = vmatprep.subr.bf16.mxu0 0
        %1108 = vmatpush1.bf16.msra.mxu0 0
        %1109 = vmatprep.subr.bf16.mxu0 0
        %1110 = vmatpush1.bf16.msra.mxu0 0
        %1111 = vmatprep.subr.bf16.mxu0 0
        %1112 = vmatpush1.bf16.msra.mxu0 %v1095
        %1113 = vmatprep.subr.bf16.mxu0 0
        %1114 = vmatpush2.bf16.msra.mxu0 0
        %1115 = vmatprep.subr.bf16.mxu0 0
        %1116 = vmatpush2.bf16.msra.mxu0 0
        %1117 = vmatprep.subr.bf16.mxu0 0
        %1118 = vmatpush2.bf16.msra.mxu0 0
        %1119 = vmatprep.subr.bf16.mxu0 0
        %1120 = vmatpush2.bf16.msra.mxu0 0
        %1121 = vmatprep.subr.bf16.mxu0 0
        %1122 = vmatpush2.bf16.msra.mxu0 0
        %1123 = vmatprep.subr.bf16.mxu0 0
        %1124 = vmatpush2.bf16.msra.mxu0 0
        %1125 = vmatprep.subr.bf16.mxu0 0
        %1126 = vmatpush2.bf16.msra.mxu0 0
        %1127 = vmatprep.subr.bf16.mxu0 0
        %1128 = vmatpush2.bf16.msra.mxu0 0
        %1129 = vmatprep.mubr.bf16.mxu0 0
        %1130 = vmatmul.mubr.bf16.gmra.mxu0 %v1092
        %v1131 = vpop.f32.mrf.mxu0
        %v1132 = vadd.f32 0.0, %v1131
        %v1133 = vpop.f32.mrf.mxu0
        %v1134 = vpop.f32.mrf.mxu0
        %v1135 = vpop.f32.mrf.mxu0
        %1136 = vdwg.mxu0
        %1137 = vrot.lane.b32.xlu0 %v683, 64
        %v1138 = vpop.permute.xlu0 %1137
        %v1140 = vsel %vm688, %v1038, 0
        %v1143 = vsel %vm1045, %v1138, 0
        %1145 = vmatprep.subr.bf16.mxu0 0
        %1146 = vmatpush1.bf16.msra.mxu0 0
        %1147 = vmatprep.subr.bf16.mxu0 0
        %1148 = vmatpush1.bf16.msra.mxu0 0
        %1149 = vmatprep.subr.bf16.mxu0 0
        %1150 = vmatpush1.bf16.msra.mxu0 0
        %1151 = vmatprep.subr.bf16.mxu0 0
        %1152 = vmatpush1.bf16.msra.mxu0 0
        %1153 = vmatprep.subr.bf16.mxu0 0
        %1154 = vmatpush1.bf16.msra.mxu0 0
        %1155 = vmatprep.subr.bf16.mxu0 0
        %1156 = vmatpush1.bf16.msra.mxu0 0
        %1157 = vmatprep.subr.bf16.mxu0 0
        %1158 = vmatpush1.bf16.msra.mxu0 0
        %1159 = vmatprep.subr.bf16.mxu0 0
        %1160 = vmatpush1.bf16.msra.mxu0 %v1143
        %1161 = vmatprep.subr.bf16.mxu0 0
        %1162 = vmatpush2.bf16.msra.mxu0 0
        %1163 = vmatprep.subr.bf16.mxu0 0
        %1164 = vmatpush2.bf16.msra.mxu0 0
        %1165 = vmatprep.subr.bf16.mxu0 0
        %1166 = vmatpush2.bf16.msra.mxu0 0
        %1167 = vmatprep.subr.bf16.mxu0 0
        %1168 = vmatpush2.bf16.msra.mxu0 0
        %1169 = vmatprep.subr.bf16.mxu0 0
        %1170 = vmatpush2.bf16.msra.mxu0 0
        %1171 = vmatprep.subr.bf16.mxu0 0
        %1172 = vmatpush2.bf16.msra.mxu0 0
        %1173 = vmatprep.subr.bf16.mxu0 0
        %1174 = vmatpush2.bf16.msra.mxu0 0
        %1175 = vmatprep.subr.bf16.mxu0 0
        %1176 = vmatpush2.bf16.msra.mxu0 0
        %1177 = vmatprep.mubr.bf16.mxu0 0
        %1178 = vmatmul.mubr.bf16.gmra.mxu0 %v1140
        %v1179 = vpop.f32.mrf.mxu0
        %v1180 = vadd.f32 0.0, %v1179
        %v1181 = vpop.f32.mrf.mxu0
        %v1182 = vpop.f32.mrf.mxu0
        %v1183 = vpop.f32.mrf.mxu0
        %1184 = vdwg.mxu0
        %1185 = vrot.lane.b32.xlu0 %v684, 64
        %v1186 = vpop.permute.xlu0 %1185
        %v1188 = vsel %vm688, %v1039, 0
        %v1191 = vsel %vm1045, %v1186, 0
        %1193 = vmatprep.subr.bf16.mxu0 0
        %1194 = vmatpush1.bf16.msra.mxu0 0
        %1195 = vmatprep.subr.bf16.mxu0 0
        %1196 = vmatpush1.bf16.msra.mxu0 0
        %1197 = vmatprep.subr.bf16.mxu0 0
        %1198 = vmatpush1.bf16.msra.mxu0 0
        %1199 = vmatprep.subr.bf16.mxu0 0
        %1200 = vmatpush1.bf16.msra.mxu0 0
        %1201 = vmatprep.subr.bf16.mxu0 0
        %1202 = vmatpush1.bf16.msra.mxu0 0
        %1203 = vmatprep.subr.bf16.mxu0 0
        %1204 = vmatpush1.bf16.msra.mxu0 0
        %1205 = vmatprep.subr.bf16.mxu0 0
        %1206 = vmatpush1.bf16.msra.mxu0 0
        %1207 = vmatprep.subr.bf16.mxu0 0
        %1208 = vmatpush1.bf16.msra.mxu0 %v1191
        %1209 = vmatprep.subr.bf16.mxu0 0
        %1210 = vmatpush2.bf16.msra.mxu0 0
        %1211 = vmatprep.subr.bf16.mxu0 0
        %1212 = vmatpush2.bf16.msra.mxu0 0
        %1213 = vmatprep.subr.bf16.mxu0 0
        %1214 = vmatpush2.bf16.msra.mxu0 0
        %1215 = vmatprep.subr.bf16.mxu0 0
        %1216 = vmatpush2.bf16.msra.mxu0 0
        %1217 = vmatprep.subr.bf16.mxu0 0
        %1218 = vmatpush2.bf16.msra.mxu0 0
        %1219 = vmatprep.subr.bf16.mxu0 0
        %1220 = vmatpush2.bf16.msra.mxu0 0
        %1221 = vmatprep.subr.bf16.mxu0 0
        %1222 = vmatpush2.bf16.msra.mxu0 0
        %1223 = vmatprep.subr.bf16.mxu0 0
        %1224 = vmatpush2.bf16.msra.mxu0 0
        %1225 = vmatprep.mubr.bf16.mxu0 0
        %1226 = vmatmul.mubr.bf16.gmra.mxu0 %v1188
        %v1227 = vpop.f32.mrf.mxu0
        %v1228 = vadd.f32 0.0, %v1227
        %v1229 = vpop.f32.mrf.mxu0
        %v1230 = vpop.f32.mrf.mxu0
        %v1231 = vpop.f32.mrf.mxu0
        %1232 = vdwg.mxu0
        %1234 = vrot.lane.b32.xlu0 %v1132, 8
        %v1235 = vpop.permute.xlu0 %1234
        %1238 = vrot.lane.b32.xlu0 %v1180, 16
        %v1239 = vpop.permute.xlu0 %1238
        %1242 = vrot.lane.b32.xlu0 %v1228, 24
        %v1243 = vpop.permute.xlu0 %1242
        %v1245 = vsel %vm688, %v1084, %v1235
        %v1246 = vsel %vm1023, %v1245, %v1239
        %v1247 = vsel %vm1025, %v1246, %v1243
        %v1248 = vpack.c.bf16 %v1247, %v1247
        %v1249 = vld [vmem:[%s5] sm:$0xf]
        %v1250 = vld [vmem:[%s5 + $0x4] sm:$0xf]
        %v1251 = vld [vmem:[%s5 + $0x8] sm:$0xf]
        %v1252 = vld [vmem:[%s5 + $0xc] sm:$0xf]
        %v1253 = vld [vmem:[#allocation9] sm:$0x1]
        %v1255 = vlaneseq
        %v1256 = vshrl.u32 %v1255, 7
        %v1257 = vsub.s32 0, %v1256
        %v1258 = vrot.slane %v1253, %v1257
        %v1264 = vunpack.c.l.b16 %v1249
        %v1265 = vunpack.c.l.b16 %v1250
        %v1266 = vunpack.c.l.b16 %v1251
        %v1267 = vunpack.c.l.b16 %v1252
        %v1268 = vpack.c.b16 %v1265, %v1264
        %v1269 = vpack.c.b16 %v1267, %v1266
        %v1273 = vsel %vm573, %v1248, 0
        %1275 = vmatprep.subr.bf16.mxu0 0
        %1276 = vmatpush1.bf16.msra.mxu0 0
        %1277 = vmatprep.subr.bf16.mxu0 0
        %1278 = vmatpush1.bf16.msra.mxu0 0
        %1279 = vmatprep.subr.bf16.mxu0 0
        %1280 = vmatpush1.bf16.msra.mxu0 0
        %1281 = vmatprep.subr.bf16.mxu0 0
        %1282 = vmatpush1.bf16.msra.mxu0 0
        %1283 = vmatprep.subr.bf16.mxu0 0
        %1284 = vmatpush1.bf16.msra.mxu0 0
        %1285 = vmatprep.subr.bf16.mxu0 0
        %1286 = vmatpush1.bf16.msra.mxu0 0
        %1287 = vmatprep.subr.bf16.mxu0 0
        %1288 = vmatpush1.bf16.msra.mxu0 %v1269
        %1289 = vmatprep.subr.bf16.mxu0 0
        %1290 = vmatpush1.bf16.msra.mxu0 %v1268
        %1291 = vmatprep.subr.bf16.mxu0 0
        %1292 = vmatpush2.bf16.msra.mxu0 0
        %1293 = vmatprep.subr.bf16.mxu0 0
        %1294 = vmatpush2.bf16.msra.mxu0 0
        %1295 = vmatprep.subr.bf16.mxu0 0
        %1296 = vmatpush2.bf16.msra.mxu0 0
        %1297 = vmatprep.subr.bf16.mxu0 0
        %1298 = vmatpush2.bf16.msra.mxu0 0
        %1299 = vmatprep.subr.bf16.mxu0 0
        %1300 = vmatpush2.bf16.msra.mxu0 0
        %1301 = vmatprep.subr.bf16.mxu0 0
        %1302 = vmatpush2.bf16.msra.mxu0 0
        %1303 = vmatprep.subr.bf16.mxu0 0
        %1304 = vmatpush2.bf16.msra.mxu0 0
        %1305 = vmatprep.subr.bf16.mxu0 0
        %1306 = vmatpush2.bf16.msra.mxu0 0
        %1307 = vmatprep.mubr.bf16.mxu0 0
        %1308 = vmatmul.mubr.bf16.gmra.mxu0 %v1273
        %v1309 = vpop.f32.mrf.mxu0
        %v1310 = vadd.f32 %v1258, %v1309
        %v1311 = vpop.f32.mrf.mxu0
        %v1312 = vpop.f32.mrf.mxu0
        %v1313 = vpop.f32.mrf.mxu0
        %1314 = vdwg.mxu0
        %v1315 = vadd.f32 %v1310, %v1310
        %v1316 = vsel %vm573, %v1315, 0.0
        %1317 = vadd.xlane.f32.xlu0 %v1316
        %v1318 = vpop.xlane.xlu0 %1317
        %v1319 = vmul.f32 %v1318, %v577
        %v1320 = vsub.f32 %v1315, %v1319
        %v1321 = vmul.f32 %v1320, %v1320
        %v1322 = vsel %vm573, %v1321, 0.0
        %1323 = vadd.xlane.f32.xlu0 %v1322
        %v1324 = vpop.xlane.xlu0 %1323
        %v1325 = vmul.f32 %v1324, %v577
        %v1326 = vadd.f32 %v1325, 1e-05
        %v1327 = vrsqrt.pop %v1326
        %v1328 = vmul.f32 %v1320, %v1327
        %v1329 = vld [vmem:[#allocation11] sm:$0x1]
        %v1331 = vlaneseq
        %v1332 = vshrl.u32 %v1331, 7
        %v1333 = vsub.s32 0, %v1332
        %v1334 = vrot.slane %v1329, %v1333
        %v1336 = vmul.f32 %v1328, %v1334
        %v1337 = vld [vmem:[#allocation12] sm:$0x1]
        %v1339 = vlaneseq
        %v1340 = vshrl.u32 %v1339, 7
        %v1341 = vsub.s32 0, %v1340
        %v1342 = vrot.slane %v1337, %v1341
        %v1344 = vadd.f32 %v1336, %v1342
        %v1345 = vpack.c.bf16 %v1344, %v1344
        %v1346 = vld [vmem:[%s9] sm:$0xf]
        %v1347 = vld [vmem:[%s9 + $0x4] sm:$0xf]
        %v1348 = vld [vmem:[%s9 + $0x8] sm:$0xf]
        %v1349 = vld [vmem:[%s9 + $0xc] sm:$0xf]
        %v1350 = vld [vmem:[%s10] sm:$0x1]
        %v1352 = vlaneseq
        %v1353 = vshrl.u32 %v1352, 7
        %v1354 = vsub.s32 0, %v1353
        %v1355 = vrot.slane %v1350, %v1354
        %v1361 = vunpack.c.l.b16 %v1346
        %v1362 = vunpack.c.l.b16 %v1347
        %v1363 = vunpack.c.l.b16 %v1348
        %v1364 = vunpack.c.l.b16 %v1349
        %v1365 = vpack.c.b16 %v1362, %v1361
        %v1366 = vpack.c.b16 %v1364, %v1363
        %v1370 = vsel %vm573, %v1345, 0
        %1372 = vmatprep.subr.bf16.mxu0 0
        %1373 = vmatpush1.bf16.msra.mxu0 0
        %1374 = vmatprep.subr.bf16.mxu0 0
        %1375 = vmatpush1.bf16.msra.mxu0 0
        %1376 = vmatprep.subr.bf16.mxu0 0
        %1377 = vmatpush1.bf16.msra.mxu0 0
        %1378 = vmatprep.subr.bf16.mxu0 0
        %1379 = vmatpush1.bf16.msra.mxu0 0
        %1380 = vmatprep.subr.bf16.mxu0 0
        %1381 = vmatpush1.bf16.msra.mxu0 0
        %1382 = vmatprep.subr.bf16.mxu0 0
        %1383 = vmatpush1.bf16.msra.mxu0 0
        %1384 = vmatprep.subr.bf16.mxu0 0
        %1385 = vmatpush1.bf16.msra.mxu0 %v1366
        %1386 = vmatprep.subr.bf16.mxu0 0
        %1387 = vmatpush1.bf16.msra.mxu0 %v1365
        %1388 = vmatprep.subr.bf16.mxu0 0
        %1389 = vmatpush2.bf16.msra.mxu0 0
        %1390 = vmatprep.subr.bf16.mxu0 0
        %1391 = vmatpush2.bf16.msra.mxu0 0
        %1392 = vmatprep.subr.bf16.mxu0 0
        %1393 = vmatpush2.bf16.msra.mxu0 0
        %1394 = vmatprep.subr.bf16.mxu0 0
        %1395 = vmatpush2.bf16.msra.mxu0 0
        %1396 = vmatprep.subr.bf16.mxu0 0
        %1397 = vmatpush2.bf16.msra.mxu0 0
        %1398 = vmatprep.subr.bf16.mxu0 0
        %1399 = vmatpush2.bf16.msra.mxu0 0
        %1400 = vmatprep.subr.bf16.mxu0 0
        %1401 = vmatpush2.bf16.msra.mxu0 0
        %1402 = vmatprep.subr.bf16.mxu0 0
        %1403 = vmatpush2.bf16.msra.mxu0 0
        %1404 = vmatprep.mubr.bf16.mxu0 0
        %1405 = vmatmul.mubr.bf16.gmra.mxu0 %v1370
        %v1406 = vpop.f32.mrf.mxu0
        %v1407 = vadd.f32 %v1355, %v1406
        %v1408 = vpop.f32.mrf.mxu0
        %v1409 = vpop.f32.mrf.mxu0
        %v1410 = vpop.f32.mrf.mxu0
        %1411 = vdwg.mxu0
        %vm1412 = vcmp.ge.f32.partialorder %v1407, 0.0
        %v1413 = vmul.f32 %v1407, 0.01
        %v1414 = vsel %vm1412, %v1407, %v1413
        %v1415 = vpack.c.bf16 %v1414, %v1414
        %v1416 = vld [vmem:[%s11] sm:$0xf]
        %v1417 = vld [vmem:[%s11 + $0x4] sm:$0xf]
        %v1418 = vld [vmem:[%s11 + $0x8] sm:$0xf]
        %v1419 = vld [vmem:[%s11 + $0xc] sm:$0xf]
        %v1420 = vld [vmem:[%s11 + $0x10] sm:$0xf]
        %v1421 = vld [vmem:[%s11 + $0x14] sm:$0xf]
        %v1422 = vld [vmem:[%s11 + $0x18] sm:$0xf]
        %v1423 = vld [vmem:[%s11 + $0x1c] sm:$0xf]
        %v1424 = vld [vmem:[%s12] sm:$0x1]
        %v1426 = vlaneseq
        %v1427 = vshrl.u32 %v1426, 7
        %v1428 = vsub.s32 0, %v1427
        %v1429 = vrot.slane %v1424, %v1428
        %v1439 = vunpack.c.l.b16 %v1416
        %v1440 = vunpack.c.l.b16 %v1417
        %v1441 = vunpack.c.l.b16 %v1418
        %v1442 = vunpack.c.l.b16 %v1419
        %v1443 = vunpack.c.l.b16 %v1420
        %v1444 = vunpack.c.l.b16 %v1421
        %v1445 = vunpack.c.l.b16 %v1422
        %v1446 = vunpack.c.l.b16 %v1423
        %v1447 = vpack.c.b16 %v1440, %v1439
        %v1448 = vpack.c.b16 %v1442, %v1441
        %v1449 = vpack.c.b16 %v1444, %v1443
        %v1450 = vpack.c.b16 %v1446, %v1445
        %vm1455 = vcmask 523264
        %v1457 = vsel %vm1455, %v1415, 0
        %1459 = vmatprep.subr.bf16.mxu0 0
        %1460 = vmatpush1.bf16.msra.mxu0 0
        %1461 = vmatprep.subr.bf16.mxu0 0
        %1462 = vmatpush1.bf16.msra.mxu0 0
        %1463 = vmatprep.subr.bf16.mxu0 0
        %1464 = vmatpush1.bf16.msra.mxu0 0
        %1465 = vmatprep.subr.bf16.mxu0 0
        %1466 = vmatpush1.bf16.msra.mxu0 0
        %1467 = vmatprep.subr.bf16.mxu0 0
        %1468 = vmatpush1.bf16.msra.mxu0 %v1450
        %1469 = vmatprep.subr.bf16.mxu0 0
        %1470 = vmatpush1.bf16.msra.mxu0 %v1449
        %1471 = vmatprep.subr.bf16.mxu0 0
        %1472 = vmatpush1.bf16.msra.mxu0 %v1448
        %1473 = vmatprep.subr.bf16.mxu0 0
        %1474 = vmatpush1.bf16.msra.mxu0 %v1447
        %1475 = vmatprep.subr.bf16.mxu0 0
        %1476 = vmatpush2.bf16.msra.mxu0 0
        %1477 = vmatprep.subr.bf16.mxu0 0
        %1478 = vmatpush2.bf16.msra.mxu0 0
        %1479 = vmatprep.subr.bf16.mxu0 0
        %1480 = vmatpush2.bf16.msra.mxu0 0
        %1481 = vmatprep.subr.bf16.mxu0 0
        %1482 = vmatpush2.bf16.msra.mxu0 0
        %1483 = vmatprep.subr.bf16.mxu0 0
        %1484 = vmatpush2.bf16.msra.mxu0 0
        %1485 = vmatprep.subr.bf16.mxu0 0
        %1486 = vmatpush2.bf16.msra.mxu0 0
        %1487 = vmatprep.subr.bf16.mxu0 0
        %1488 = vmatpush2.bf16.msra.mxu0 0
        %1489 = vmatprep.subr.bf16.mxu0 0
        %1490 = vmatpush2.bf16.msra.mxu0 0
        %1491 = vmatprep.mubr.bf16.mxu0 0
        %1492 = vmatmul.mubr.bf16.gmra.mxu0 %v1457
        %v1493 = vpop.f32.mrf.mxu0
        %v1494 = vadd.f32 %v1429, %v1493
        %v1495 = vpop.f32.mrf.mxu0
        %v1496 = vpop.f32.mrf.mxu0
        %v1497 = vpop.f32.mrf.mxu0
        %1498 = vdwg.mxu0
        %v1499 = vadd.f32 %v1494, %v1494
        %1500 = vst.msk [vmem:[#allocation2] sm:$0xff] %vm573, %v1499
        %p1501 = scmp.eq.s32.totalorder %s41, 1
        // Predicated region
        $region101: #{tpu_custom_call.1} parent=71 // pred_check
          %p1502 = pneg %p1501
        $region102: #{tpu_custom_call.1} parent=71 // pred_check_branch
          %1504 = sbr.rel (%p1502) target = $region104
        $region103: #{tpu_custom_call.1} parent=71 // pred_region
          %1505 = vst.msk [vmem:[%s552] sm:$0xff] %vm573, %v1499
        $region104: #{tpu_custom_call.1} parent=71 // pred_fallthru
          _
        %s1506 = sand.u32 %s334, 1
        %s1507 = scalar_lea.sflag [#allocation5], %s1506
        %s1508 = sand.u32 %s334, 1
        %s1509 = smul.addr %s1508, 8
        %s1510 = scalar_lea.vmem [#allocation14], %s1509
        %s1511 = sand.u32 %s362, 1
        %s1512 = scalar_lea.sflag [#allocation16], %s1511
        %s1513 = sand.u32 %s362, 1
        %s1514 = smul.addr %s1513, 4
        %s1515 = scalar_lea.vmem [#allocation15], %s1514
        // Predicated region
        $region105: #{tpu_custom_call.1} parent=71 // pred_check
          %p1516 = pneg %p344
        $region106: #{tpu_custom_call.1} parent=71 // pred_check_branch
          %1518 = sbr.rel (%p1516) target = $region108
        $region107: #{tpu_custom_call.1} parent=71 // pred_region
          %s1520 = ssub.s32 128, 128
          %1521 = vsyncadd %s1507, %s1520
          %s1522 = smul.addr %s40, 128
          %s1523 = scalar_lea.hbm %s13, %s1522
          %s1525 = sshll.u32 %s1510, 4
          %s1526 = int_to_ptr.vmem [resolvable:$true] %s1525
          %1528 = dma.vmem_to_hbm [thread:$0]  %s1526, 128, %s1523, %s1507
        $region108: #{tpu_custom_call.1} parent=71 // pred_fallthru
          _
        // Predicated region
        $region109: #{tpu_custom_call.1} parent=71 // pred_check
          %p1529 = pneg %p372
        $region110: #{tpu_custom_call.1} parent=71 // pred_check_branch
          %1531 = sbr.rel (%p1529) target = $region112
        $region111: #{tpu_custom_call.1} parent=71 // pred_region
          %s1533 = ssub.s32 64, 64
          %1534 = vsyncadd %s1512, %s1533
          %s1535 = smul.addr %s41, 2
          %s1536 = sadd.s32 %s40, %s1535
          %s1537 = smul.addr %s1536, 64
          %s1538 = scalar_lea.hbm %s14, %s1537
          %s1540 = sshll.u32 %s1515, 4
          %s1541 = int_to_ptr.vmem [resolvable:$true] %s1540
          %1543 = dma.vmem_to_hbm [thread:$0]  %s1541, 64, %s1538, %s1512
        $region112: #{tpu_custom_call.1} parent=71 // pred_fallthru
          _
      $region72: #{tpu_custom_call.1} parent=5 // pred_fallthru
        _
      %p1544 = scmp.le.s32.totalorder 2, %s31
      // Predicated region
      $region113: #{tpu_custom_call.1} parent=5 // pred_check
        %p1545 = pneg %p1544
      $region114: #{tpu_custom_call.1} parent=5 // pred_check_branch
        %1547 = sbr.rel (%p1545) target = $region116
      $region115: #{tpu_custom_call.1} parent=5 // pred_region
        %s1548 = ssub.s32 %s31, 2
        // Predicated region
        $region117: #{tpu_custom_call.1} parent=115 // pred_check
          %p1549 = pneg %p350
        $region118: #{tpu_custom_call.1} parent=115 // pred_check_branch
          %1551 = sbr.rel (%p1549) target = $region120
        $region119: #{tpu_custom_call.1} parent=115 // pred_region
          %s1552 = sand.u32 %s335, 1
          %s1553 = scalar_lea.sflag [#allocation5], %s1552
          %s1554 = sand.u32 %s335, 1
          %s1555 = smul.addr %s1554, 8
          %s1556 = scalar_lea.vmem [#allocation14], %s1555
          %1557 = dma.done %s1553, 128
        $region120: #{tpu_custom_call.1} parent=115 // pred_fallthru
          _
        // Predicated region
        $region121: #{tpu_custom_call.1} parent=115 // pred_check
          %p1558 = pneg %p378
        $region122: #{tpu_custom_call.1} parent=115 // pred_check_branch
          %1560 = sbr.rel (%p1558) target = $region124
        $region123: #{tpu_custom_call.1} parent=115 // pred_region
          %s1561 = sand.u32 %s363, 1
          %s1562 = scalar_lea.sflag [#allocation16], %s1561
          %s1563 = sand.u32 %s363, 1
          %s1564 = smul.addr %s1563, 4
          %s1565 = scalar_lea.vmem [#allocation15], %s1564
          %1566 = dma.done %s1562, 64
        $region124: #{tpu_custom_call.1} parent=115 // pred_fallthru
          _
      $region116: #{tpu_custom_call.1} parent=5 // pred_fallthru
        _
    $region6: #{tpu_custom_call.1} parent=1 // loop_footer
      %s35 = sadd.s32 1, %s31
    $region7: #{tpu_custom_call.1} parent=1 // loop_footer_branch
      %30 = sbr.rel target = $region3
    $region8: #{tpu_custom_call.1} parent=1 // loop_exit
      _
    %1567 = vsyncpa [#allocation4], 1
    %s1568 = scalar_lea.sflag [#allocation4], 1
    %1569 = vsyncpa %s1568, 1
    %1570 = vsyncpa [#allocation7], 1
    %1571 = vsyncpa [#allocation10], 1
    %1572 = vsyncpa [#allocation13], 1
    %1573 = vsyncpa [#allocation5], 1
    %s1574 = scalar_lea.sflag [#allocation5], 1
    %1575 = vsyncpa %s1574, 1
    %1576 = vsyncpa [#allocation16], 1
    %s1577 = scalar_lea.sflag [#allocation16], 1
    %1578 = vsyncpa %s1577, 1

</llo_original>
